<compile_context>
chip_gen: v5e
topology: v5e:2x2
jax: 0.10.0
libtpu: 0.0.40
codegen_flags: <defaults>
</compile_context>

<pallas_src>
import functools

import jax
import jax.numpy as jnp
import numpy as np
from jax import lax
from jax.experimental import pallas as pl
from jax.experimental.pallas import tpu as pltpu


def _softmax_last(e):
    """Numerically stable softmax along the last axis (matches torch dim=-1)."""
    m = jnp.max(e, axis=-1, keepdims=True)
    p = jnp.exp(e - m)
    s = jnp.sum(p, axis=-1, keepdims=True)
    # Reciprocal (EUP) + broadcast multiply instead of an N^2 VPU divide.
    return p * pl.reciprocal(s, approx=False)


def _sa_kernel(x_ref, wqk_ref, bqk_ref, wv_ref, bv_ref, gamma_ref,
               out_ref, attn_ref, vattn_ref,
               q_scr, k_scr, v_scr, *, cq, tq):
    qi = pl.program_id(1)

    # Compute full-image Q/K/V projections once per batch element and cache
    # them in VMEM scratch (Wq|Wk fused -> single skinny matmul).
    @pl.when(qi == 0)
    def _():
        x_full = x_ref[0]                                              # (C, N)
        qk = jnp.dot(wqk_ref[...], x_full,
                     preferred_element_type=jnp.float32) + bqk_ref[...]
        q_scr[...] = qk[:cq]
        k_scr[...] = qk[cq:]
        v_scr[...] = jnp.dot(wv_ref[...], x_full,
                             preferred_element_type=jnp.float32) + bv_ref[...]

    col = pl.multiple_of(qi * tq, tq)
    q_t = q_scr[:, pl.ds(col, tq)]                                     # (cq, tq)
    k = k_scr[...]                                                     # (cq, N)
    v = v_scr[...]                                                     # (C,  N)
    v_t = v_scr[:, pl.ds(col, tq)]                                     # (C, tq)
    x_t = x_ref[0, :, pl.ds(col, tq)]                                  # (C, tq)

    # energy[n, m] = sum_c Q[c, n] * K[c, m]   (contract over channels)
    energy = lax.dot_general(q_t, k, (((0,), (0,)), ((), ())),
                             preferred_element_type=jnp.float32)       # (tq, N)
    attn = _softmax_last(energy)
    attn_ref[0] = attn

    # v_energy[n, m] = sum_c V[c, n] * V[c, m]
    v_energy = lax.dot_general(v_t, v, (((0,), (0,)), ((), ())),
                               preferred_element_type=jnp.float32)     # (tq, N)
    vattn_ref[0] = _softmax_last(v_energy)

    # out[:, n] = sum_m V[:, m] * attn[n, m]   ==  V @ attn^T
    o = lax.dot_general(v, attn, (((1,), (1,)), ((), ())),
                        preferred_element_type=jnp.float32)            # (C, tq)
    out_ref[0] = gamma_ref[0] * o + x_t


def _vmem_bytes(C, N, cq, tq):
    f32 = 4
    io_blocks = 2 * (C * N + C * tq + 2 * tq * N) * f32   # double-buffered x/out/attn/vattn
    scratch = (2 * cq + C) * N * f32                       # cached Q/K/V projections
    temps = (6 * tq * N + 2 * C * tq) * f32                # energy/attn/v_energy temporaries
    weights = (2 * cq * C + C * C + 2 * cq + C) * f32
    return io_blocks + scratch + temps + weights


def _pick_tq(N, C, cq, budget=40 * 1024 * 1024):
    divisors = [c for c in (512, 256, 128) if N % c == 0]
    for c in divisors:
        if _vmem_bytes(C, N, cq, c) <= budget:
            return c
    if divisors:
        return divisors[-1]
    return N  # tiny spatial size: whole-row block


@functools.partial(jax.jit, static_argnames=("tq",))
def self_attention_block(x, wq, bq, wk, bk, wv, bv, gamma, *, tq=None):
    """x: (B, C, H, W) f32.  wq/wk: (Cq, C), wv: (C, C), biases 1-D, gamma scalar."""
    B, C, H, W = x.shape
    N = H * W
    Cq = wq.shape[0]

    if tq is None:
        tq = _pick_tq(N, C, Cq)
    assert N % tq == 0, (N, tq)
    T = N // tq

    # NCHW -> (B, C, N): pure reshape, no transpose.
    x_cn = x.reshape(B, C, N).astype(jnp.float32)
    wqk = jnp.concatenate([wq, wk], axis=0).astype(jnp.float32)        # (2Cq, C)
    bqk = jnp.concatenate([bq, bk], axis=0).reshape(2 * Cq, 1).astype(jnp.float32)
    wv_ = wv.astype(jnp.float32)                                       # (C, C)
    bv_ = bv.reshape(C, 1).astype(jnp.float32)
    g = jnp.asarray(gamma, jnp.float32).reshape(1)

    const = lambda shape: pl.BlockSpec(shape, lambda b, q: (0,) * len(shape))

    flops = int(2 * B * N * C * (2 * Cq + C)          # projections
                + 2 * B * N * N * (Cq + 2 * C)        # QK^T, VV^T, V @ A^T
                + 6 * B * N * N)                      # softmax arithmetic
    transc = int(2 * B * N * N)
    bytes_acc = int(4 * (2 * B * C * N + 2 * B * N * N
                         + 2 * Cq * C + C * C + 2 * Cq + C + 1))

    vmem_limit = int(min(56 * 1024 * 1024,
                         max(32 * 1024 * 1024, 2 * _vmem_bytes(C, N, Cq, tq))))

    out_cn, attn, vattn = pl.pallas_call(
        functools.partial(_sa_kernel, cq=Cq, tq=tq),
        out_shape=(
            jax.ShapeDtypeStruct((B, C, N), jnp.float32),
            jax.ShapeDtypeStruct((B, N, N), jnp.float32),
            jax.ShapeDtypeStruct((B, N, N), jnp.float32),
        ),
        grid_spec=pltpu.PrefetchScalarGridSpec(
            num_scalar_prefetch=0,
            grid=(B, T),
            in_specs=[
                pl.BlockSpec((1, C, N), lambda b, q: (b, 0, 0)),       # x (fetched once / batch)
                const((2 * Cq, C)),                                    # Wq|Wk fused
                const((2 * Cq, 1)),                                    # bq|bk
                const((C, C)),                                         # Wv
                const((C, 1)),                                         # bv
                pl.BlockSpec(memory_space=pltpu.MemorySpace.SMEM),     # gamma scalar
            ],
            out_specs=[
                pl.BlockSpec((1, C, tq), lambda b, q: (b, 0, q)),      # out slab (lane-dense)
                pl.BlockSpec((1, tq, N), lambda b, q: (b, q, 0)),      # attention rows
                pl.BlockSpec((1, tq, N), lambda b, q: (b, q, 0)),      # value attention rows
            ],
            scratch_shapes=[
                pltpu.VMEM((Cq, N), jnp.float32),                      # Q projection cache
                pltpu.VMEM((Cq, N), jnp.float32),                      # K projection cache
                pltpu.VMEM((C, N), jnp.float32),                       # V projection cache
            ],
        ),
        compiler_params=pltpu.CompilerParams(
            dimension_semantics=("parallel", "arbitrary"),
            vmem_limit_bytes=vmem_limit,
        ),
        cost_estimate=pl.CostEstimate(
            flops=flops, transcendentals=transc, bytes_accessed=bytes_acc),
    )(x_cn, wqk, bqk, wv_, bv_, g)

    # (B, C, N) is already NCHW up to a free reshape.
    out = out_cn.reshape(B, C, H, W)
    return out, attn, vattn


def reference(x, wq, bq, wk, bk, wv, bv, gamma):
    """Pure-JAX replica of the PyTorch forward (for verification)."""
    B, C, H, W = x.shape
    N = H * W

    def conv1x1(x, w, b):  # x:(B,C,H,W), w:(Cout,Cin), b:(Cout,)
        return jnp.einsum('bchw,oc->bohw', x, w) + b[None, :, None, None]

    pq = conv1x1(x, wq, bq).reshape(B, -1, N).transpose(0, 2, 1)   # (B, N, Cq)
    pk = conv1x1(x, wk, bk).reshape(B, -1, N)                      # (B, Cq, N)
    energy = jnp.einsum('bnc,bcm->bnm', pq, pk)
    attention = jax.nn.softmax(energy, axis=-1)
    pv = conv1x1(x, wv, bv).reshape(B, -1, N)                      # (B, C, N)
    v_energy = jnp.einsum('bcn,bcm->bnm', pv, pv)
    value_attention = jax.nn.softmax(v_energy, axis=-1)
    out = jnp.einsum('bcn,bmn->bcm', pv, attention)                # V @ A^T
    out = out.reshape(B, C, H, W)
    out = gamma * out + x
    return out, attention, value_attention


if __name__ == "__main__":
    B, C, H, W = 2, 16, 16, 16     # N = 256 pixels, Cq = C // 8 = 2
    Cq = C // 8

    key = jax.random.PRNGKey(0)
    ks = jax.random.split(key, 8)

    # Deterministic parameter init (PyTorch conv default: U(-1/sqrt(fan_in), +)).
    bound = 1.0 / np.sqrt(C)
    wq = jax.random.uniform(ks[0], (Cq, C), jnp.float32, -bound, bound)
    bq = jax.random.uniform(ks[1], (Cq,), jnp.float32, -bound, bound)
    wk = jax.random.uniform(ks[2], (Cq, C), jnp.float32, -bound, bound)
    bk = jax.random.uniform(ks[3], (Cq,), jnp.float32, -bound, bound)
    wv = jax.random.uniform(ks[4], (C, C), jnp.float32, -bound, bound)
    bv = jax.random.uniform(ks[5], (C,), jnp.float32, -bound, bound)
    # Module __init__ uses gamma = 0; use a nonzero deterministic value so the
    # gamma*out + x path is actually exercised/verified.
    gamma = jnp.float32(0.5)

    x = jax.random.normal(ks[6], (B, C, H, W), jnp.float32)

    # tq=128 -> 2 query tiles per batch: exercises the tiled grid and the
    # once-per-batch K/V/Q scratch caching path.
    out, attn, vattn = self_attention_block(x, wq, bq, wk, bk, wv, bv, gamma, tq=128)
    jax.block_until_ready((out, attn, vattn))

    out_r, attn_r, vattn_r = reference(x, wq, bq, wk, bk, wv, bv, gamma)
    np.testing.assert_allclose(np.asarray(out), np.asarray(out_r), atol=1e-4, rtol=1e-4)
    np.testing.assert_allclose(np.asarray(attn), np.asarray(attn_r), atol=1e-5, rtol=1e-4)
    np.testing.assert_allclose(np.asarray(vattn), np.asarray(vattn_r), atol=1e-5, rtol=1e-4)

    print("KERNEL_OK")
</pallas_src>

<mosaic_0001>
module attributes {stable_mosaic.version = 11 : i64} {
  func.func @_sa_kernel(%arg0: i32, %arg1: i32, %arg2: memref<1x16x256xf32, #tpu.memory_space<vmem>>, %arg3: memref<4x16xf32, #tpu.memory_space<vmem>>, %arg4: memref<4x1xf32, #tpu.memory_space<vmem>>, %arg5: memref<16x16xf32, #tpu.memory_space<vmem>>, %arg6: memref<16x1xf32, #tpu.memory_space<vmem>>, %arg7: memref<1xf32, #tpu.memory_space<smem>>, %arg8: memref<1x16x128xf32, #tpu.memory_space<vmem>>, %arg9: memref<1x128x256xf32, #tpu.memory_space<vmem>>, %arg10: memref<1x128x256xf32, #tpu.memory_space<vmem>>, %arg11: memref<2x256xf32, #tpu.memory_space<vmem>>, %arg12: memref<2x256xf32, #tpu.memory_space<vmem>>, %arg13: memref<16x256xf32, #tpu.memory_space<vmem>>) attributes {dimension_semantics = [#tpu.dimension_semantics<parallel>, #tpu.dimension_semantics<arbitrary>], iteration_bounds = array<i64: 2, 2>, scalar_prefetch = 0 : i64, scratch_operands = 3 : i64, tpu.core_type = #tpu.core_type<tc>, window_params = [{transform_indices = @transform_0, window_bounds = array<i64: 1, 16, 256>}, {pipeline_mode = #tpu.pipeline_mode<synchronous>, transform_indices = @transform_1, window_bounds = array<i64: 4, 16>}, {pipeline_mode = #tpu.pipeline_mode<synchronous>, transform_indices = @transform_2, window_bounds = array<i64: 4, 1>}, {pipeline_mode = #tpu.pipeline_mode<synchronous>, transform_indices = @transform_3, window_bounds = array<i64: 16, 16>}, {pipeline_mode = #tpu.pipeline_mode<synchronous>, transform_indices = @transform_4, window_bounds = array<i64: 16, 1>}, {transform_indices = @transform_5, window_bounds = array<i64: 1>}, {transform_indices = @transform_6, window_bounds = array<i64: 1, 16, 128>}, {transform_indices = @transform_7, window_bounds = array<i64: 1, 128, 256>}, {transform_indices = @transform_8, window_bounds = array<i64: 1, 128, 256>}]} {
    %c0_i32 = arith.constant 0 : i32
    %0 = arith.cmpi eq, %arg1, %c0_i32 : i32
    %1 = arith.extui %0 : i1 to i32
    %c0_i32_0 = arith.constant 0 : i32
    %2 = arith.cmpi ne, %1, %c0_i32_0 : i32
    scf.if %2 {
      %c0_24 = arith.constant 0 : index
      %c0_25 = arith.constant 0 : index
      %c0_26 = arith.constant 0 : index
      %50 = vector.load %arg2[%c0_24, %c0_25, %c0_26] : memref<1x16x256xf32, #tpu.memory_space<vmem>>, vector<1x16x256xf32>
      %51 = vector.shape_cast %50 : vector<1x16x256xf32> to vector<16x256xf32>
      %c0_27 = arith.constant 0 : index
      %c0_28 = arith.constant 0 : index
      %52 = vector.load %arg3[%c0_27, %c0_28] : memref<4x16xf32, #tpu.memory_space<vmem>>, vector<4x16xf32>
      %cst_29 = arith.constant dense<0.000000e+00> : vector<4x256xf32>
      %53 = tpu.matmul %52, %51, %cst_29 {dimension_numbers = #tpu.dot_dimension_numbers<[1], [0], [0], [1], [0, 0, 1, 1], [], []>} : vector<4x16xf32>, vector<16x256xf32>, vector<4x256xf32> -> vector<4x256xf32>
      %c0_30 = arith.constant 0 : index
      %c0_31 = arith.constant 0 : index
      %54 = vector.load %arg4[%c0_30, %c0_31] : memref<4x1xf32, #tpu.memory_space<vmem>>, vector<4x1xf32>
      %55 = vector.broadcast %54 : vector<4x1xf32> to vector<4x256xf32>
      %56 = arith.addf %53, %55 : vector<4x256xf32>
      %57 = vector.extract_strided_slice %56 {offsets = [0, 0], sizes = [2, 256], strides = [1, 1]} : vector<4x256xf32> to vector<2x256xf32>
      %c0_32 = arith.constant 0 : index
      %c0_33 = arith.constant 0 : index
      %58 = vector.load %arg11[%c0_32, %c0_33] : memref<2x256xf32, #tpu.memory_space<vmem>>, vector<2x256xf32>
      tpu.vector_store %arg11[%c0_32, %c0_33], %57 {strides = array<i32>} : memref<2x256xf32, #tpu.memory_space<vmem>>, vector<2x256xf32>,
      %59 = vector.extract_strided_slice %56 {offsets = [2, 0], sizes = [2, 256], strides = [1, 1]} : vector<4x256xf32> to vector<2x256xf32>
      %c0_34 = arith.constant 0 : index
      %c0_35 = arith.constant 0 : index
      %60 = vector.load %arg12[%c0_34, %c0_35] : memref<2x256xf32, #tpu.memory_space<vmem>>, vector<2x256xf32>
      tpu.vector_store %arg12[%c0_34, %c0_35], %59 {strides = array<i32>} : memref<2x256xf32, #tpu.memory_space<vmem>>, vector<2x256xf32>,
      %c0_36 = arith.constant 0 : index
      %c0_37 = arith.constant 0 : index
      %61 = vector.load %arg5[%c0_36, %c0_37] : memref<16x16xf32, #tpu.memory_space<vmem>>, vector<16x16xf32>
      %cst_38 = arith.constant dense<0.000000e+00> : vector<16x256xf32>
      %62 = tpu.matmul %61, %51, %cst_38 {dimension_numbers = #tpu.dot_dimension_numbers<[1], [0], [0], [1], [0, 0, 1, 1], [], []>} : vector<16x16xf32>, vector<16x256xf32>, vector<16x256xf32> -> vector<16x256xf32>
      %c0_39 = arith.constant 0 : index
      %c0_40 = arith.constant 0 : index
      %63 = vector.load %arg6[%c0_39, %c0_40] : memref<16x1xf32, #tpu.memory_space<vmem>>, vector<16x1xf32>
      %64 = vector.broadcast %63 : vector<16x1xf32> to vector<16x256xf32>
      %65 = arith.addf %62, %64 : vector<16x256xf32>
      %c0_41 = arith.constant 0 : index
      %c0_42 = arith.constant 0 : index
      %66 = vector.load %arg13[%c0_41, %c0_42] : memref<16x256xf32, #tpu.memory_space<vmem>>, vector<16x256xf32>
      tpu.vector_store %arg13[%c0_41, %c0_42], %65 {strides = array<i32>} : memref<16x256xf32, #tpu.memory_space<vmem>>, vector<16x256xf32>,
    } else {
    }
    %c128_i32 = arith.constant 128 : i32
    %3 = arith.muli %arg1, %c128_i32 : i32
    %4 = tpu.assume_multiple %3, 128 : i32
    %c0 = arith.constant 0 : index
    %5 = arith.index_cast %4 : i32 to index
    %6 = vector.load %arg11[%c0, %5] : memref<2x256xf32, #tpu.memory_space<vmem>>, vector<2x128xf32>
    %c0_1 = arith.constant 0 : index
    %c0_2 = arith.constant 0 : index
    %7 = vector.load %arg12[%c0_1, %c0_2] : memref<2x256xf32, #tpu.memory_space<vmem>>, vector<2x256xf32>
    %c0_3 = arith.constant 0 : index
    %c0_4 = arith.constant 0 : index
    %8 = vector.load %arg13[%c0_3, %c0_4] : memref<16x256xf32, #tpu.memory_space<vmem>>, vector<16x256xf32>
    %c0_5 = arith.constant 0 : index
    %9 = arith.index_cast %4 : i32 to index
    %10 = vector.load %arg13[%c0_5, %9] : memref<16x256xf32, #tpu.memory_space<vmem>>, vector<16x128xf32>
    %c0_6 = arith.constant 0 : index
    %c0_7 = arith.constant 0 : index
    %11 = arith.index_cast %4 : i32 to index
    %12 = vector.load %arg2[%c0_6, %c0_7, %11] : memref<1x16x256xf32, #tpu.memory_space<vmem>>, vector<1x16x128xf32>
    %13 = vector.shape_cast %12 : vector<1x16x128xf32> to vector<16x128xf32>
    %cst = arith.constant dense<0.000000e+00> : vector<128x256xf32>
    %14 = tpu.matmul %6, %7, %cst {dimension_numbers = #tpu.dot_dimension_numbers<[0], [0], [1], [1], [0, 1, 1, 1], [], []>} : vector<2x128xf32>, vector<2x256xf32>, vector<128x256xf32> -> vector<128x256xf32>
    %cst_8 = arith.constant dense<0xFF800000> : vector<128xf32>
    %15 = vector.multi_reduction <maximumf>, %14, %cst_8 [1] : vector<128x256xf32> to vector<128xf32>
    %16 = vector.shape_cast %15 : vector<128xf32> to vector<128x1xf32>
    %17 = vector.broadcast %16 : vector<128x1xf32> to vector<128x256xf32>
    %18 = arith.subf %14, %17 : vector<128x256xf32>
    %19 = math.exp %18 : vector<128x256xf32>
    %cst_9 = arith.constant dense<0.000000e+00> : vector<128xf32>
    %20 = vector.multi_reduction <add>, %19, %cst_9 [1] : vector<128x256xf32> to vector<128xf32>
    %21 = vector.shape_cast %20 : vector<128xf32> to vector<128x1xf32>
    %22 = tpu.reciprocal %21 : vector<128x1xf32> -> vector<128x1xf32>
    %23 = vector.broadcast %22 : vector<128x1xf32> to vector<128x256xf32>
    %24 = arith.mulf %19, %23 : vector<128x256xf32>
    %c0_10 = arith.constant 0 : index
    %c0_11 = arith.constant 0 : index
    %c0_12 = arith.constant 0 : index
    %25 = vector.load %arg9[%c0_10, %c0_11, %c0_12] : memref<1x128x256xf32, #tpu.memory_space<vmem>>, vector<1x128x256xf32>
    %26 = vector.shape_cast %25 : vector<1x128x256xf32> to vector<128x256xf32>
    %27 = vector.shape_cast %24 : vector<128x256xf32> to vector<1x128x256xf32>
    tpu.vector_store %arg9[%c0_10, %c0_11, %c0_12], %27 {strides = array<i32>} : memref<1x128x256xf32, #tpu.memory_space<vmem>>, vector<1x128x256xf32>,
    %cst_13 = arith.constant dense<0.000000e+00> : vector<128x256xf32>
    %28 = tpu.matmul %10, %8, %cst_13 {dimension_numbers = #tpu.dot_dimension_numbers<[0], [0], [1], [1], [0, 1, 1, 1], [], []>} : vector<16x128xf32>, vector<16x256xf32>, vector<128x256xf32> -> vector<128x256xf32>
    %cst_14 = arith.constant dense<0xFF800000> : vector<128xf32>
    %29 = vector.multi_reduction <maximumf>, %28, %cst_14 [1] : vector<128x256xf32> to vector<128xf32>
    %30 = vector.shape_cast %29 : vector<128xf32> to vector<128x1xf32>
    %31 = vector.broadcast %30 : vector<128x1xf32> to vector<128x256xf32>
    %32 = arith.subf %28, %31 : vector<128x256xf32>
    %33 = math.exp %32 : vector<128x256xf32>
    %cst_15 = arith.constant dense<0.000000e+00> : vector<128xf32>
    %34 = vector.multi_reduction <add>, %33, %cst_15 [1] : vector<128x256xf32> to vector<128xf32>
    %35 = vector.shape_cast %34 : vector<128xf32> to vector<128x1xf32>
    %36 = tpu.reciprocal %35 : vector<128x1xf32> -> vector<128x1xf32>
    %37 = vector.broadcast %36 : vector<128x1xf32> to vector<128x256xf32>
    %38 = arith.mulf %33, %37 : vector<128x256xf32>
    %c0_16 = arith.constant 0 : index
    %c0_17 = arith.constant 0 : index
    %c0_18 = arith.constant 0 : index
    %39 = vector.load %arg10[%c0_16, %c0_17, %c0_18] : memref<1x128x256xf32, #tpu.memory_space<vmem>>, vector<1x128x256xf32>
    %40 = vector.shape_cast %39 : vector<1x128x256xf32> to vector<128x256xf32>
    %41 = vector.shape_cast %38 : vector<128x256xf32> to vector<1x128x256xf32>
    tpu.vector_store %arg10[%c0_16, %c0_17, %c0_18], %41 {strides = array<i32>} : memref<1x128x256xf32, #tpu.memory_space<vmem>>, vector<1x128x256xf32>,
    %cst_19 = arith.constant dense<0.000000e+00> : vector<16x128xf32>
    %42 = tpu.matmul %8, %24, %cst_19 {dimension_numbers = #tpu.dot_dimension_numbers<[1], [1], [0], [0], [0, 0, 1, 0], [], []>} : vector<16x256xf32>, vector<128x256xf32>, vector<16x128xf32> -> vector<16x128xf32>
    %c0_20 = arith.constant 0 : index
    %43 = memref.load %arg7[%c0_20] : memref<1xf32, #tpu.memory_space<smem>>
    %44 = vector.broadcast %43 : f32 to vector<16x128xf32>
    %45 = arith.mulf %44, %42 : vector<16x128xf32>
    %46 = arith.addf %45, %13 : vector<16x128xf32>
    %c0_21 = arith.constant 0 : index
    %c0_22 = arith.constant 0 : index
    %c0_23 = arith.constant 0 : index
    %47 = vector.load %arg8[%c0_21, %c0_22, %c0_23] : memref<1x16x128xf32, #tpu.memory_space<vmem>>, vector<1x16x128xf32>
    %48 = vector.shape_cast %47 : vector<1x16x128xf32> to vector<16x128xf32>
    %49 = vector.shape_cast %46 : vector<16x128xf32> to vector<1x16x128xf32>
    tpu.vector_store %arg8[%c0_21, %c0_22, %c0_23], %49 {strides = array<i32>} : memref<1x16x128xf32, #tpu.memory_space<vmem>>, vector<1x16x128xf32>,
    return
  }
  func.func @transform_0(%arg0: i32, %arg1: i32) -> (i32, i32, i32) {
    %c0_i32 = arith.constant 0 : i32
    %c0_i32_0 = arith.constant 0 : i32
    %c0_i32_1 = arith.constant 0 : i32
    return %arg0, %c0_i32, %c0_i32_0 : i32, i32, i32
  }
  func.func @transform_1(%arg0: i32, %arg1: i32) -> (i32, i32) {
    %c0_i32 = arith.constant 0 : i32
    %c0_i32_0 = arith.constant 0 : i32
    %c0_i32_1 = arith.constant 0 : i32
    return %c0_i32, %c0_i32_0 : i32, i32
  }
  func.func @transform_2(%arg0: i32, %arg1: i32) -> (i32, i32) {
    %c0_i32 = arith.constant 0 : i32
    %c0_i32_0 = arith.constant 0 : i32
    %c0_i32_1 = arith.constant 0 : i32
    return %c0_i32, %c0_i32_0 : i32, i32
  }
  func.func @transform_3(%arg0: i32, %arg1: i32) -> (i32, i32) {
    %c0_i32 = arith.constant 0 : i32
    %c0_i32_0 = arith.constant 0 : i32
    %c0_i32_1 = arith.constant 0 : i32
    return %c0_i32, %c0_i32_0 : i32, i32
  }
  func.func @transform_4(%arg0: i32, %arg1: i32) -> (i32, i32) {
    %c0_i32 = arith.constant 0 : i32
    %c0_i32_0 = arith.constant 0 : i32
    %c0_i32_1 = arith.constant 0 : i32
    return %c0_i32, %c0_i32_0 : i32, i32
  }
  func.func @transform_5(%arg0: i32, %arg1: i32) -> i32 {
    %c0_i32 = arith.constant 0 : i32
    %c0_i32_0 = arith.constant 0 : i32
    return %c0_i32 : i32
  }
  func.func @transform_6(%arg0: i32, %arg1: i32) -> (i32, i32, i32) {
    %c0_i32 = arith.constant 0 : i32
    %c0_i32_0 = arith.constant 0 : i32
    return %arg0, %c0_i32, %arg1 : i32, i32, i32
  }
  func.func @transform_7(%arg0: i32, %arg1: i32) -> (i32, i32, i32) {
    %c0_i32 = arith.constant 0 : i32
    %c0_i32_0 = arith.constant 0 : i32
    return %arg0, %arg1, %c0_i32 : i32, i32, i32
  }
  func.func @transform_8(%arg0: i32, %arg1: i32) -> (i32, i32, i32) {
    %c0_i32 = arith.constant 0 : i32
    %c0_i32_0 = arith.constant 0 : i32
    return %arg0, %arg1, %c0_i32 : i32, i32, i32
  }
}

</mosaic_0001>

<llo_original>
// kernel: self_attention_block.1
$region0: #{self_attention_block.1}
  #allocation0 [shape = 'u32[]', space=smem, size = 0x4, offset = 0x4, fixed_abs, tag = 'smem constant byte address 0x4 - core index']
  #allocation1 [shape = 'u32[72,128]{1,0:T(1,128)}', space=vmem, size = 0x9000, scoped, tag = 'internal scratch']
  #allocation2 [shape = 'f32[2,256]{1,0:T(2,128)}', space=vmem, size = 0x800, scoped, tag = 'scratch operand']
  #allocation3 [shape = 'f32[2,256]{1,0:T(2,128)}', space=vmem, size = 0x800, scoped, tag = 'scratch operand']
  #allocation4 [shape = 'f32[16,256]{1,0:T(8,128)}', space=vmem, size = 0x4000, scoped, tag = 'scratch operand']
  #allocation5 [shape = 'f32[1]{0:T(128)S(6)}', space=smem, size = 0x200, scoped, tag = 'scoped memory for self_attention_block.1']
  %s0 = inlined_call_operand.vmem [shape: f32[2,16,256], index: 0, kind: input, shape index: {}]
  %s1 = inlined_call_operand.vmem [shape: f32[4,16], index: 1, kind: input, shape index: {}]
  %s2 = inlined_call_operand.vmem [shape: f32[4,1], index: 2, kind: input, shape index: {}]
  %s3 = inlined_call_operand.vmem [shape: f32[16,16], index: 3, kind: input, shape index: {}]
  %s4 = inlined_call_operand.vmem [shape: f32[16,1], index: 4, kind: input, shape index: {}]
  %s5 = inlined_call_operand.<no memory space> [shape: f32[1], index: 5, kind: input, shape index: {}]
  %s6 = inlined_call_operand.vmem [shape: f32[2,16,256], index: 6, kind: output, shape index: {0}]
  %s7 = inlined_call_operand.hbm [shape: f32[2,256,256], index: 7, kind: output, shape index: {1}]
  %s8 = inlined_call_operand.hbm [shape: f32[2,256,256], index: 8, kind: output, shape index: {2}]
  %9 = xla_tuple %s6, %s7, %s8
  %s10 = sld [smem:[#allocation0]]
  $region111: #{self_attention_block.1} parent=0
    _
  %s12 = ssub.s32 1, %s10
  %s13 = scalar_select 0, %s12, %s10
  %14 = sst [smem:[#allocation5]] %s5
  $region1: #{self_attention_block.1} parent=0
    #allocation6 [shape = 'u8[16384]{0}', space=vmem, size = 0x4000, scoped, tag = 'output window, operand 0']
    #allocation7 [shape = 'u8[262144]{0}', space=vmem, size = 0x40000, scoped, tag = 'output window, operand 1']
    #allocation8 [shape = 's32[2]{0}', space=sflag, size = 0x8, scoped, tag = 'scoped memory for self_attention_block.1']
    #allocation9 [shape = 'u8[262144]{0}', space=vmem, size = 0x40000, scoped, tag = 'output window, operand 2']
    #allocation10 [shape = 's32[2]{0}', space=sflag, size = 0x8, scoped, tag = 'scoped memory for self_attention_block.1']
    %15 = vsyncpa [#allocation8], 0
    %s16 = scalar_lea.sflag [#allocation8], 1
    %17 = vsyncpa %s16, 0
    %18 = vsyncpa [#allocation10], 0
    %s19 = scalar_lea.sflag [#allocation10], 1
    %20 = vsyncpa %s19, 0
    loop: start=0, step=1, limit=6
    $region2: #{self_attention_block.1} parent=1 // loop_pre_header
      _
    $region3: #{self_attention_block.1} parent=1 // loop_header
      %s22 = sphi 0, %s26
      %p23 = scmp.ge.s32.totalorder %s22, 6
      %s29 = sphi 0, %s41
      %s30 = sphi 0, %s37
      %s31 = sphi 0, %s29
      %s32 = sphi 0, %s30
      %s33 = sphi 0, %s31
      %s34 = sphi 0, %s32
      %s44 = sphi 0, %s46
      %s47 = sphi 0, %s44
      %s48 = sphi 0, %s47
      %s64 = sphi 0, %s48
      %s68 = sphi 0, %s68
      %s70 = sphi 0, %s68
      %s71 = sphi 0, %s70
      %s85 = sphi 0, %s71
      %s89 = sphi 0, %s89
      %s91 = sphi 0, %s89
      %s92 = sphi 0, %s91
      %s106 = sphi 0, %s92
      %s110 = sphi 0, %s110
      %s112 = sphi 0, %s110
      %s113 = sphi 0, %s112
      %s127 = sphi 0, %s113
      %s131 = sphi 0, %s131
      %s133 = sphi 0, %s131
      %s134 = sphi 0, %s133
      %s148 = sphi 0, %s134
      %s152 = sphi 0, %s152
      %s154 = sphi 0, %s152
      %s155 = sphi 0, %s154
      %s169 = sphi 0, %s155
      %s177 = sphi 0, %s179
      %s180 = sphi 0, %s177
      %s181 = sphi 0, %s180
      %s197 = sphi 0, %s181
      %s205 = sphi 0, %s207
      %s208 = sphi 0, %s205
      %s209 = sphi 0, %s208
      %s225 = sphi 0, %s209
      %s233 = sphi 0, %s235
      %s236 = sphi 0, %s233
      %s237 = sphi 0, %s236
      %s253 = sphi 0, %s237
    $region4: #{self_attention_block.1} parent=1 // loop_header_branch
      %25 = sbr.rel (%p23) target = $region8
    $region5: #{self_attention_block.1} parent=1 // loop_body
      %s27 = ssub.s32 %s22, 1
      %s28 = ssub.s32 %s22, 2
      %s35 = sadd.s32 1, %s30
      %p36 = scmp.ge.s32.totalorder %s35, 2
      %s37 = scalar_select %p36, 0, %s35
      %s38 = sadd.s32 1, %s29
      %s39 = scalar_select %p36, %s38, %s29
      %p40 = scmp.ge.s32.totalorder %s39, 2
      %s41 = scalar_select %p40, 0, %s39
      %s42 = ssub.s32 %s29, %s41
      %p43 = scmp.eq.s32.totalorder %s42, 0
      %s45 = sadd.s32 %s44, 1
      %s46 = scalar_select %p43, %s44, %s45
      %p49 = pneg %p43
      %p50 = scmp.eq.s32.totalorder %s22, 3
      %p51 = por %p49, %p50
      %p52 = scmp.ne.s32.totalorder %s44, %s47
      %p53 = scmp.eq.s32.totalorder %s22, 0
      %p54 = por %p52, %p53
      %p55 = scmp.ne.s32.totalorder %s44, %s47
      %p56 = scmp.eq.s32.totalorder %s27, 3
      %p57 = por %p55, %p56
      %p58 = scmp.ne.s32.totalorder %s47, %s48
      %p59 = scmp.eq.s32.totalorder %s27, 0
      %p60 = por %p58, %p59
      %p61 = scmp.ne.s32.totalorder %s47, %s48
      %p62 = scmp.eq.s32.totalorder %s28, 3
      %p63 = por %p61, %p62
      %p65 = scmp.ne.s32.totalorder %s48, %s64
      %p66 = scmp.eq.s32.totalorder %s28, 0
      %p67 = por %p65, %p66
      %s69 = sadd.s32 %s68, 1
      %p72 = scmp.eq.s32.totalorder %s22, 3
      %p73 = scmp.ne.s32.totalorder %s68, %s70
      %p74 = scmp.eq.s32.totalorder %s22, 0
      %p75 = por %p73, %p74
      %p76 = scmp.ne.s32.totalorder %s68, %s70
      %p77 = scmp.eq.s32.totalorder %s27, 3
      %p78 = por %p76, %p77
      %p79 = scmp.ne.s32.totalorder %s70, %s71
      %p80 = scmp.eq.s32.totalorder %s27, 0
      %p81 = por %p79, %p80
      %p82 = scmp.ne.s32.totalorder %s70, %s71
      %p83 = scmp.eq.s32.totalorder %s28, 3
      %p84 = por %p82, %p83
      %p86 = scmp.ne.s32.totalorder %s71, %s85
      %p87 = scmp.eq.s32.totalorder %s28, 0
      %p88 = por %p86, %p87
      %s90 = sadd.s32 %s89, 1
      %p93 = scmp.eq.s32.totalorder %s22, 3
      %p94 = scmp.ne.s32.totalorder %s89, %s91
      %p95 = scmp.eq.s32.totalorder %s22, 0
      %p96 = por %p94, %p95
      %p97 = scmp.ne.s32.totalorder %s89, %s91
      %p98 = scmp.eq.s32.totalorder %s27, 3
      %p99 = por %p97, %p98
      %p100 = scmp.ne.s32.totalorder %s91, %s92
      %p101 = scmp.eq.s32.totalorder %s27, 0
      %p102 = por %p100, %p101
      %p103 = scmp.ne.s32.totalorder %s91, %s92
      %p104 = scmp.eq.s32.totalorder %s28, 3
      %p105 = por %p103, %p104
      %p107 = scmp.ne.s32.totalorder %s92, %s106
      %p108 = scmp.eq.s32.totalorder %s28, 0
      %p109 = por %p107, %p108
      %s111 = sadd.s32 %s110, 1
      %p114 = scmp.eq.s32.totalorder %s22, 3
      %p115 = scmp.ne.s32.totalorder %s110, %s112
      %p116 = scmp.eq.s32.totalorder %s22, 0
      %p117 = por %p115, %p116
      %p118 = scmp.ne.s32.totalorder %s110, %s112
      %p119 = scmp.eq.s32.totalorder %s27, 3
      %p120 = por %p118, %p119
      %p121 = scmp.ne.s32.totalorder %s112, %s113
      %p122 = scmp.eq.s32.totalorder %s27, 0
      %p123 = por %p121, %p122
      %p124 = scmp.ne.s32.totalorder %s112, %s113
      %p125 = scmp.eq.s32.totalorder %s28, 3
      %p126 = por %p124, %p125
      %p128 = scmp.ne.s32.totalorder %s113, %s127
      %p129 = scmp.eq.s32.totalorder %s28, 0
      %p130 = por %p128, %p129
      %s132 = sadd.s32 %s131, 1
      %p135 = scmp.eq.s32.totalorder %s22, 3
      %p136 = scmp.ne.s32.totalorder %s131, %s133
      %p137 = scmp.eq.s32.totalorder %s22, 0
      %p138 = por %p136, %p137
      %p139 = scmp.ne.s32.totalorder %s131, %s133
      %p140 = scmp.eq.s32.totalorder %s27, 3
      %p141 = por %p139, %p140
      %p142 = scmp.ne.s32.totalorder %s133, %s134
      %p143 = scmp.eq.s32.totalorder %s27, 0
      %p144 = por %p142, %p143
      %p145 = scmp.ne.s32.totalorder %s133, %s134
      %p146 = scmp.eq.s32.totalorder %s28, 3
      %p147 = por %p145, %p146
      %p149 = scmp.ne.s32.totalorder %s134, %s148
      %p150 = scmp.eq.s32.totalorder %s28, 0
      %p151 = por %p149, %p150
      %s153 = sadd.s32 %s152, 1
      %p156 = scmp.eq.s32.totalorder %s22, 3
      %p157 = scmp.ne.s32.totalorder %s152, %s154
      %p158 = scmp.eq.s32.totalorder %s22, 0
      %p159 = por %p157, %p158
      %p160 = scmp.ne.s32.totalorder %s152, %s154
      %p161 = scmp.eq.s32.totalorder %s27, 3
      %p162 = por %p160, %p161
      %p163 = scmp.ne.s32.totalorder %s154, %s155
      %p164 = scmp.eq.s32.totalorder %s27, 0
      %p165 = por %p163, %p164
      %p166 = scmp.ne.s32.totalorder %s154, %s155
      %p167 = scmp.eq.s32.totalorder %s28, 3
      %p168 = por %p166, %p167
      %p170 = scmp.ne.s32.totalorder %s155, %s169
      %p171 = scmp.eq.s32.totalorder %s28, 0
      %p172 = por %p170, %p171
      %s173 = ssub.s32 %s29, %s41
      %s174 = ssub.s32 %s30, %s37
      %s175 = sor.u32 %s173, %s174
      %p176 = scmp.eq.s32.totalorder %s175, 0
      %s178 = sadd.s32 %s177, 1
      %s179 = scalar_select %p176, %s177, %s178
      %p182 = pneg %p176
      %p183 = scmp.eq.s32.totalorder %s22, 3
      %p184 = por %p182, %p183
      %p185 = scmp.ne.s32.totalorder %s177, %s180
      %p186 = scmp.eq.s32.totalorder %s22, 0
      %p187 = por %p185, %p186
      %p188 = scmp.ne.s32.totalorder %s177, %s180
      %p189 = scmp.eq.s32.totalorder %s27, 3
      %p190 = por %p188, %p189
      %p191 = scmp.ne.s32.totalorder %s180, %s181
      %p192 = scmp.eq.s32.totalorder %s27, 0
      %p193 = por %p191, %p192
      %p194 = scmp.ne.s32.totalorder %s180, %s181
      %p195 = scmp.eq.s32.totalorder %s28, 3
      %p196 = por %p194, %p195
      %p198 = scmp.ne.s32.totalorder %s181, %s197
      %p199 = scmp.eq.s32.totalorder %s28, 0
      %p200 = por %p198, %p199
      %s201 = ssub.s32 %s29, %s41
      %s202 = ssub.s32 %s30, %s37
      %s203 = sor.u32 %s201, %s202
      %p204 = scmp.eq.s32.totalorder %s203, 0
      %s206 = sadd.s32 %s205, 1
      %s207 = scalar_select %p204, %s205, %s206
      %p210 = pneg %p204
      %p211 = scmp.eq.s32.totalorder %s22, 3
      %p212 = por %p210, %p211
      %p213 = scmp.ne.s32.totalorder %s205, %s208
      %p214 = scmp.eq.s32.totalorder %s22, 0
      %p215 = por %p213, %p214
      %p216 = scmp.ne.s32.totalorder %s205, %s208
      %p217 = scmp.eq.s32.totalorder %s27, 3
      %p218 = por %p216, %p217
      %p219 = scmp.ne.s32.totalorder %s208, %s209
      %p220 = scmp.eq.s32.totalorder %s27, 0
      %p221 = por %p219, %p220
      %p222 = scmp.ne.s32.totalorder %s208, %s209
      %p223 = scmp.eq.s32.totalorder %s28, 3
      %p224 = por %p222, %p223
      %p226 = scmp.ne.s32.totalorder %s209, %s225
      %p227 = scmp.eq.s32.totalorder %s28, 0
      %p228 = por %p226, %p227
      %s229 = ssub.s32 %s29, %s41
      %s230 = ssub.s32 %s30, %s37
      %s231 = sor.u32 %s229, %s230
      %p232 = scmp.eq.s32.totalorder %s231, 0
      %s234 = sadd.s32 %s233, 1
      %s235 = scalar_select %p232, %s233, %s234
      %p238 = pneg %p232
      %p239 = scmp.eq.s32.totalorder %s22, 3
      %p240 = por %p238, %p239
      %p241 = scmp.ne.s32.totalorder %s233, %s236
      %p242 = scmp.eq.s32.totalorder %s22, 0
      %p243 = por %p241, %p242
      %p244 = scmp.ne.s32.totalorder %s233, %s236
      %p245 = scmp.eq.s32.totalorder %s27, 3
      %p246 = por %p244, %p245
      %p247 = scmp.ne.s32.totalorder %s236, %s237
      %p248 = scmp.eq.s32.totalorder %s27, 0
      %p249 = por %p247, %p248
      %p250 = scmp.ne.s32.totalorder %s236, %s237
      %p251 = scmp.eq.s32.totalorder %s28, 3
      %p252 = por %p250, %p251
      %p254 = scmp.ne.s32.totalorder %s237, %s253
      %p255 = scmp.eq.s32.totalorder %s28, 0
      %p256 = por %p254, %p255
      %p257 = scmp.le.s32.totalorder 1, %s22
      %p258 = scmp.lt.s32.totalorder %s22, 5
      %p259 = pnand %p257, %p258
      %p260 = pneg %p259
      // Predicated region
      $region9: #{self_attention_block.1} parent=5 // pred_check
        _
      $region10: #{self_attention_block.1} parent=5 // pred_check_branch
        %262 = sbr.rel (%p259) target = $region12
      $region11: #{self_attention_block.1} parent=5 // pred_region
        %s263 = ssub.s32 %s22, 1
        // Predicated region
        $region13: #{self_attention_block.1} parent=11 // pred_check
          %p264 = pneg %p81
        $region14: #{self_attention_block.1} parent=11 // pred_check_branch
          %266 = sbr.rel (%p264) target = $region16
        $region15: #{self_attention_block.1} parent=11 // pred_region
          _
        $region16: #{self_attention_block.1} parent=11 // pred_fallthru
          _
        // Predicated region
        $region17: #{self_attention_block.1} parent=11 // pred_check
          %p267 = pneg %p102
        $region18: #{self_attention_block.1} parent=11 // pred_check_branch
          %269 = sbr.rel (%p267) target = $region20
        $region19: #{self_attention_block.1} parent=11 // pred_region
          _
        $region20: #{self_attention_block.1} parent=11 // pred_fallthru
          _
        // Predicated region
        $region21: #{self_attention_block.1} parent=11 // pred_check
          %p270 = pneg %p123
        $region22: #{self_attention_block.1} parent=11 // pred_check_branch
          %272 = sbr.rel (%p270) target = $region24
        $region23: #{self_attention_block.1} parent=11 // pred_region
          _
        $region24: #{self_attention_block.1} parent=11 // pred_fallthru
          _
        // Predicated region
        $region25: #{self_attention_block.1} parent=11 // pred_check
          %p273 = pneg %p144
        $region26: #{self_attention_block.1} parent=11 // pred_check_branch
          %275 = sbr.rel (%p273) target = $region28
        $region27: #{self_attention_block.1} parent=11 // pred_region
          _
        $region28: #{self_attention_block.1} parent=11 // pred_fallthru
          _
        // Predicated region
        $region29: #{self_attention_block.1} parent=11 // pred_check
          %p276 = pneg %p165
        $region30: #{self_attention_block.1} parent=11 // pred_check_branch
          %278 = sbr.rel (%p276) target = $region32
        $region31: #{self_attention_block.1} parent=11 // pred_region
          _
        $region32: #{self_attention_block.1} parent=11 // pred_fallthru
          _
      $region12: #{self_attention_block.1} parent=5 // pred_fallthru
        _
      %p279 = scmp.lt.s32.totalorder %s22, 4
      // Predicated region
      $region33: #{self_attention_block.1} parent=5 // pred_check
        %p280 = pneg %p279
      $region34: #{self_attention_block.1} parent=5 // pred_check_branch
        %282 = sbr.rel (%p280) target = $region36
      $region35: #{self_attention_block.1} parent=5 // pred_region
        // Predicated region
        $region37: #{self_attention_block.1} parent=35 // pred_check
          %p283 = pneg %p54
        $region38: #{self_attention_block.1} parent=35 // pred_check_branch
          %285 = sbr.rel (%p283) target = $region40
        $region39: #{self_attention_block.1} parent=35 // pred_region
          %p286 = scmp.lt.s32.totalorder %s29, 1
          %s287 = scalar_select %p286, %s29, 1
          %s288 = smul.addr %s287, 4
          %s289 = smul.addr %s288, 8
          %s290 = scalar_lea.vmem %s0, %s289
        $region40: #{self_attention_block.1} parent=35 // pred_fallthru
          _
      $region36: #{self_attention_block.1} parent=5 // pred_fallthru
        _
      %p291 = scmp.le.s32.totalorder 1, %s22
      %p292 = scmp.lt.s32.totalorder %s22, 5
      %p293 = pnand %p291, %p292
      %p294 = pneg %p293
      // Predicated region
      $region41: #{self_attention_block.1} parent=5 // pred_check
        _
      $region42: #{self_attention_block.1} parent=5 // pred_check_branch
        %296 = sbr.rel (%p293) target = $region44
      $region43: #{self_attention_block.1} parent=5 // pred_region
        %s297 = ssub.s32 %s22, 1
        %p298 = scmp.lt.s32.totalorder %s31, 1
        %s299 = scalar_select %p298, %s31, 1
        %s300 = smul.addr %s299, 4
        %s301 = smul.addr %s300, 8
        %s302 = scalar_lea.vmem %s0, %s301
        %p303 = pneg %p60
        %p304 = pneg %p57
        %p305 = pneg %p81
        %p306 = pneg %p78
        %p307 = pneg %p102
        %p308 = pneg %p99
        %p309 = pneg %p123
        %p310 = pneg %p120
        %p311 = pneg %p144
        %p312 = pneg %p141
        %p313 = pneg %p165
        %p314 = pneg %p162
        %p315 = pneg %p193
        %p316 = pneg %p190
        %s317 = sand.u32 %s180, 1
        %s318 = sand.u32 %s180, 1
        %s319 = smul.addr %s318, 16
        %s320 = scalar_lea.vmem [#allocation6], %s319
        %p321 = pneg %p221
        %p322 = pneg %p218
        %s323 = sand.u32 %s208, 1
        %s324 = scalar_lea.sflag [#allocation8], %s323
        %s325 = sand.u32 %s208, 1
        %s326 = smul.addr %s325, 256
        %s327 = scalar_lea.vmem [#allocation7], %s326
        %p328 = pneg %p249
        %p329 = pneg %p246
        %s330 = sand.u32 %s236, 1
        %s331 = scalar_lea.sflag [#allocation10], %s330
        %s332 = sand.u32 %s236, 1
        %s333 = smul.addr %s332, 256
        %s334 = scalar_lea.vmem [#allocation9], %s333
        %p335 = scmp.lt.s32.totalorder %s31, 1
        %s336 = scalar_select %p335, %s31, 1
        %s337 = smul.addr %s336, 4
        %s338 = smul.addr %s337, 8
        %s339 = scalar_lea.vmem %s0, %s338
        %s340 = smul.u32 16, %s32
        %s341 = smul.u32 16, %s32
        %p342 = scmp.eq.s32.totalorder %s32, 0
        // Predicated region
        $region45: #{self_attention_block.1} parent=43 // pred_check
          %p343 = pneg %p342
        $region46: #{self_attention_block.1} parent=43 // pred_check_branch
          %345 = sbr.rel (%p343) target = $region48
        $region47: #{self_attention_block.1} parent=43 // pred_region
          %v346 = vld [vmem:[%s339] sm:$0xff]
          %v347 = vld [vmem:[%s339 + $0x8] sm:$0xff]
          %v348 = vld [vmem:[%s339 + $0x10] sm:$0xff]
          %v349 = vld [vmem:[%s339 + $0x18] sm:$0xff]
          %v350 = vld [vmem:[%s1] sm:$0xf]
          %v351 = vld [vmem:[%s2] sm:$0xf]
          %353 = vset.pattern.permute.xlu0 0
          %354 = vperm.xlu0 %353, %v351
          %v355 = vpop.permute.xlu0 %354
          %vm357 = vcmask 130048
          %v359 = vsel %vm357, %v350, 0
          %361 = vmatpush.msra.mxu0 0.0
          %362 = vmatpush.msra.mxu0 0.0
          %363 = vmatpush.msra.mxu0 0.0
          %364 = vmatpush.msra.mxu0 0.0
          %365 = vmatpush.msra.mxu0 0.0
          %366 = vmatpush.msra.mxu0 0.0
          %367 = vmatpush.msra.mxu0 0.0
          %368 = vmatpush.msra.mxu0 0.0
          %369 = vmatpush.msra.mxu0 0.0
          %370 = vmatpush.msra.mxu0 0.0
          %371 = vmatpush.msra.mxu0 0.0
          %372 = vmatpush.msra.mxu0 0.0
          %373 = vmatpush.msra.mxu0 0.0
          %374 = vmatpush.msra.mxu0 0.0
          %375 = vmatpush.msra.mxu0 %v348
          %376 = vmatpush.msra.mxu0 %v346
          %377 = vmatmul.f32.gmra.mxu0 %v359
          %v378 = vpop.f32.mrf.mxu0
          %v379 = vadd.f32 %v355, %v378
          %380 = vdwg.mxu0
          %381 = vmatpush.msra.mxu0 0.0
          %382 = vmatpush.msra.mxu0 0.0
          %383 = vmatpush.msra.mxu0 0.0
          %384 = vmatpush.msra.mxu0 0.0
          %385 = vmatpush.msra.mxu0 0.0
          %386 = vmatpush.msra.mxu0 0.0
          %387 = vmatpush.msra.mxu0 0.0
          %388 = vmatpush.msra.mxu0 0.0
          %389 = vmatpush.msra.mxu0 0.0
          %390 = vmatpush.msra.mxu0 0.0
          %391 = vmatpush.msra.mxu0 0.0
          %392 = vmatpush.msra.mxu0 0.0
          %393 = vmatpush.msra.mxu0 0.0
          %394 = vmatpush.msra.mxu0 0.0
          %395 = vmatpush.msra.mxu0 %v349
          %396 = vmatpush.msra.mxu0 %v347
          %397 = vmatmul.f32.gmra.mxu0 %v359
          %v398 = vpop.f32.mrf.mxu0
          %v399 = vadd.f32 %v355, %v398
          %400 = vdwg.mxu0
          %v403 = vrot.slane %v399, 6
          %vm404 = vcmask 1041408
          %v405 = vsel %vm404, %v379, %v403
          %407 = vst [vmem:[#allocation2] sm:$0xf] %v405
          %408 = vst.sshfl [vmem:[#allocation1] sm:$0xff pattern:$0x73625140] %v379
          %409 = vst.sshfl [vmem:[#allocation1 + $0x8] sm:$0xff pattern:$0x73625140] %v399
          %s410 = scalar_lea.vmem [#allocation1], 1
          %v411 = vld [vmem:[%s410] ss:$4 sm:$0xff]
          %413 = vst [vmem:[#allocation3] sm:$0xf] %v411
          %v414 = vld [vmem:[%s3] sm:$0xff]
          %v415 = vld [vmem:[%s3 + $0x8] sm:$0xff]
          %v416 = vld [vmem:[%s4] sm:$0xff]
          %v417 = vld [vmem:[%s4 + $0x8] sm:$0xff]
          %419 = vset.pattern.permute.xlu0 0
          %420 = vperm.xlu0 %419, %v416
          %v421 = vpop.permute.xlu0 %420
          %424 = vset.pattern.permute.xlu0 0
          %425 = vperm.xlu0 %424, %v417
          %v426 = vpop.permute.xlu0 %425
          %v429 = vsel %vm357, %v414, 0
          %v432 = vsel %vm357, %v415, 0
          %434 = vmatpush.msra.mxu0 0.0
          %435 = vmatpush.msra.mxu0 0.0
          %436 = vmatpush.msra.mxu0 0.0
          %437 = vmatpush.msra.mxu0 0.0
          %438 = vmatpush.msra.mxu0 0.0
          %439 = vmatpush.msra.mxu0 0.0
          %440 = vmatpush.msra.mxu0 0.0
          %441 = vmatpush.msra.mxu0 0.0
          %442 = vmatpush.msra.mxu0 0.0
          %443 = vmatpush.msra.mxu0 0.0
          %444 = vmatpush.msra.mxu0 0.0
          %445 = vmatpush.msra.mxu0 0.0
          %446 = vmatpush.msra.mxu0 0.0
          %447 = vmatpush.msra.mxu0 0.0
          %448 = vmatpush.msra.mxu0 %v348
          %449 = vmatpush.msra.mxu0 %v346
          %450 = vmatmul.f32.gmra.mxu0 %v429
          %v451 = vpop.f32.mrf.mxu0
          %v452 = vadd.f32 %v421, %v451
          %453 = vmatmul.f32.gmra.mxu0 %v432
          %v454 = vpop.f32.mrf.mxu0
          %v455 = vadd.f32 %v426, %v454
          %456 = vdwg.mxu0
          %457 = vmatpush.msra.mxu0 0.0
          %458 = vmatpush.msra.mxu0 0.0
          %459 = vmatpush.msra.mxu0 0.0
          %460 = vmatpush.msra.mxu0 0.0
          %461 = vmatpush.msra.mxu0 0.0
          %462 = vmatpush.msra.mxu0 0.0
          %463 = vmatpush.msra.mxu0 0.0
          %464 = vmatpush.msra.mxu0 0.0
          %465 = vmatpush.msra.mxu0 0.0
          %466 = vmatpush.msra.mxu0 0.0
          %467 = vmatpush.msra.mxu0 0.0
          %468 = vmatpush.msra.mxu0 0.0
          %469 = vmatpush.msra.mxu0 0.0
          %470 = vmatpush.msra.mxu0 0.0
          %471 = vmatpush.msra.mxu0 %v349
          %472 = vmatpush.msra.mxu0 %v347
          %473 = vmatmul.f32.gmra.mxu0 %v429
          %v474 = vpop.f32.mrf.mxu0
          %v475 = vadd.f32 %v421, %v474
          %476 = vmatmul.f32.gmra.mxu0 %v432
          %v477 = vpop.f32.mrf.mxu0
          %v478 = vadd.f32 %v426, %v477
          %479 = vdwg.mxu0
          %480 = vst [vmem:[#allocation4] sm:$0xff] %v452
          %481 = vst [vmem:[#allocation4 + $0x8] sm:$0xff] %v475
          %482 = vst [vmem:[#allocation4 + $0x10] sm:$0xff] %v455
          %483 = vst [vmem:[#allocation4 + $0x18] sm:$0xff] %v478
        $region48: #{self_attention_block.1} parent=43 // pred_fallthru
          _
        %s484 = smul.u32 %s32, 128
        %s485 = sshra.s32 %s484, 7
        %s486 = sand.u32 %s484, 127
        %s487 = smul.addr %s485, 2
        %s488 = scalar_lea.vmem [#allocation2], %s487
        %v489 = vld [vmem:[%s488] sm:$0x3]
        %v490 = vld [vmem:[#allocation3] sm:$0xf]
        %v491 = vld [vmem:[#allocation4] sm:$0xff]
        %v492 = vld [vmem:[#allocation4 + $0x8] sm:$0xff]
        %v493 = vld [vmem:[#allocation4 + $0x10] sm:$0xff]
        %v494 = vld [vmem:[#allocation4 + $0x18] sm:$0xff]
        %s495 = smul.addr %s485, 8
        %s496 = scalar_lea.vmem [#allocation4], %s495
        %v497 = vld [vmem:[%s496] sm:$0xff]
        %v498 = vld [vmem:[%s496 + $0x10] sm:$0xff]
        %s499 = smul.addr %s485, 8
        %s500 = scalar_lea.vmem %s339, %s499
        %v501 = vld [vmem:[%s500] sm:$0xff]
        %v502 = vld [vmem:[%s500 + $0x10] sm:$0xff]
        %503 = vxpose.xlu0.b32.start [1/16] %v489, 128
        %504 = vxpose.xlu0.b32.cont [2/16] 0.0, 128
        %505 = vxpose.xlu0.b32.cont [3/16] 0.0, 128
        %506 = vxpose.xlu0.b32.cont [4/16] 0.0, 128
        %507 = vxpose.xlu0.b32.cont [5/16] 0.0, 128
        %508 = vxpose.xlu0.b32.cont [6/16] 0.0, 128
        %509 = vxpose.xlu0.b32.cont [7/16] 0.0, 128
        %510 = vxpose.xlu0.b32.cont [8/16] 0.0, 128
        %511 = vxpose.xlu0.b32.cont [9/16] 0.0, 128
        %512 = vxpose.xlu0.b32.cont [10/16] 0.0, 128
        %513 = vxpose.xlu0.b32.cont [11/16] 0.0, 128
        %514 = vxpose.xlu0.b32.cont [12/16] 0.0, 128
        %515 = vxpose.xlu0.b32.cont [13/16] 0.0, 128
        %516 = vxpose.xlu0.b32.cont [14/16] 0.0, 128
        %517 = vxpose.xlu0.b32.cont [15/16] 0.0, 128
        %518 = vxpose.xlu0.b32.end [16/16] 0.0, 128
        %v519 = vpop.trf.xlu0
        %v520 = vpop.trf.xlu0
        %v521 = vpop.trf.xlu0
        %v522 = vpop.trf.xlu0
        %v523 = vpop.trf.xlu0
        %v524 = vpop.trf.xlu0
        %v525 = vpop.trf.xlu0
        %v526 = vpop.trf.xlu0
        %v527 = vpop.trf.xlu0
        %v528 = vpop.trf.xlu0
        %v529 = vpop.trf.xlu0
        %v530 = vpop.trf.xlu0
        %v531 = vpop.trf.xlu0
        %v532 = vpop.trf.xlu0
        %v533 = vpop.trf.xlu0
        %v534 = vpop.trf.xlu0
        %536 = vst [vmem:[#allocation1] ss:$4 sm:$0xff] %v490
        %v537 = vld.sshfl [vmem:[#allocation1] sm:$0xff pattern:$0x73625140]
        %v538 = vld.sshfl [vmem:[#allocation1 + $0x8] sm:$0xff pattern:$0x73625140]
        %vm539 = vcmask 15360
        %v541 = vsel %vm539, %v519, 0
        %v544 = vsel %vm539, %v520, 0
        %v547 = vsel %vm539, %v521, 0
        %v550 = vsel %vm539, %v522, 0
        %v553 = vsel %vm539, %v523, 0
        %v556 = vsel %vm539, %v524, 0
        %v559 = vsel %vm539, %v525, 0
        %v562 = vsel %vm539, %v526, 0
        %v565 = vsel %vm539, %v527, 0
        %v568 = vsel %vm539, %v528, 0
        %v571 = vsel %vm539, %v529, 0
        %v574 = vsel %vm539, %v530, 0
        %v577 = vsel %vm539, %v531, 0
        %v580 = vsel %vm539, %v532, 0
        %v583 = vsel %vm539, %v533, 0
        %v586 = vsel %vm539, %v534, 0
        %vm588 = vcmask 1041408
        %v589 = vsel %vm588, %v537, 0
        %v591 = vsel %vm588, %v538, 0
        %593 = vmatpush.msra.mxu0 0.0
        %594 = vmatpush.msra.mxu0 0.0
        %595 = vmatpush.msra.mxu0 0.0
        %596 = vmatpush.msra.mxu0 0.0
        %597 = vmatpush.msra.mxu0 0.0
        %598 = vmatpush.msra.mxu0 0.0
        %599 = vmatpush.msra.mxu0 0.0
        %600 = vmatpush.msra.mxu0 0.0
        %601 = vmatpush.msra.mxu0 0.0
        %602 = vmatpush.msra.mxu0 0.0
        %603 = vmatpush.msra.mxu0 0.0
        %604 = vmatpush.msra.mxu0 0.0
        %605 = vmatpush.msra.mxu0 0.0
        %606 = vmatpush.msra.mxu0 0.0
        %607 = vmatpush.msra.mxu0 0.0
        %608 = vmatpush.msra.mxu0 %v589
        %609 = vmatmul.f32.gmra.mxu0 %v541
        %v610 = vpop.f32.mrf.mxu0
        %v611 = vadd.f32 0.0, %v610
        %612 = vmatmul.f32.gmra.mxu0 %v544
        %v613 = vpop.f32.mrf.mxu0
        %v614 = vadd.f32 0.0, %v613
        %615 = vmatmul.f32.gmra.mxu0 %v547
        %v616 = vpop.f32.mrf.mxu0
        %v617 = vadd.f32 0.0, %v616
        %618 = vmatmul.f32.gmra.mxu0 %v550
        %v619 = vpop.f32.mrf.mxu0
        %v620 = vadd.f32 0.0, %v619
        %621 = vmatmul.f32.gmra.mxu0 %v553
        %v622 = vpop.f32.mrf.mxu0
        %v623 = vadd.f32 0.0, %v622
        %624 = vmatmul.f32.gmra.mxu0 %v556
        %v625 = vpop.f32.mrf.mxu0
        %v626 = vadd.f32 0.0, %v625
        %627 = vmatmul.f32.gmra.mxu0 %v559
        %v628 = vpop.f32.mrf.mxu0
        %v629 = vadd.f32 0.0, %v628
        %630 = vmatmul.f32.gmra.mxu0 %v562
        %v631 = vpop.f32.mrf.mxu0
        %v632 = vadd.f32 0.0, %v631
        %633 = vmatmul.f32.gmra.mxu0 %v565
        %v634 = vpop.f32.mrf.mxu0
        %v635 = vadd.f32 0.0, %v634
        %636 = vmatmul.f32.gmra.mxu0 %v568
        %v637 = vpop.f32.mrf.mxu0
        %v638 = vadd.f32 0.0, %v637
        %639 = vmatmul.f32.gmra.mxu0 %v571
        %v640 = vpop.f32.mrf.mxu0
        %v641 = vadd.f32 0.0, %v640
        %642 = vmatmul.f32.gmra.mxu0 %v574
        %v643 = vpop.f32.mrf.mxu0
        %v644 = vadd.f32 0.0, %v643
        %645 = vmatmul.f32.gmra.mxu0 %v577
        %v646 = vpop.f32.mrf.mxu0
        %v647 = vadd.f32 0.0, %v646
        %648 = vmatmul.f32.gmra.mxu0 %v580
        %v649 = vpop.f32.mrf.mxu0
        %v650 = vadd.f32 0.0, %v649
        %651 = vmatmul.f32.gmra.mxu0 %v583
        %v652 = vpop.f32.mrf.mxu0
        %v653 = vadd.f32 0.0, %v652
        %654 = vmatmul.f32.gmra.mxu0 %v586
        %v655 = vpop.f32.mrf.mxu0
        %v656 = vadd.f32 0.0, %v655
        %657 = vdwg.mxu0
        %658 = vmatpush.msra.mxu0 0.0
        %659 = vmatpush.msra.mxu0 0.0
        %660 = vmatpush.msra.mxu0 0.0
        %661 = vmatpush.msra.mxu0 0.0
        %662 = vmatpush.msra.mxu0 0.0
        %663 = vmatpush.msra.mxu0 0.0
        %664 = vmatpush.msra.mxu0 0.0
        %665 = vmatpush.msra.mxu0 0.0
        %666 = vmatpush.msra.mxu0 0.0
        %667 = vmatpush.msra.mxu0 0.0
        %668 = vmatpush.msra.mxu0 0.0
        %669 = vmatpush.msra.mxu0 0.0
        %670 = vmatpush.msra.mxu0 0.0
        %671 = vmatpush.msra.mxu0 0.0
        %672 = vmatpush.msra.mxu0 0.0
        %673 = vmatpush.msra.mxu0 %v591
        %674 = vmatmul.f32.gmra.mxu0 %v541
        %v675 = vpop.f32.mrf.mxu0
        %v676 = vadd.f32 0.0, %v675
        %677 = vmatmul.f32.gmra.mxu0 %v544
        %v678 = vpop.f32.mrf.mxu0
        %v679 = vadd.f32 0.0, %v678
        %680 = vmatmul.f32.gmra.mxu0 %v547
        %v681 = vpop.f32.mrf.mxu0
        %v682 = vadd.f32 0.0, %v681
        %683 = vmatmul.f32.gmra.mxu0 %v550
        %v684 = vpop.f32.mrf.mxu0
        %v685 = vadd.f32 0.0, %v684
        %686 = vmatmul.f32.gmra.mxu0 %v553
        %v687 = vpop.f32.mrf.mxu0
        %v688 = vadd.f32 0.0, %v687
        %689 = vmatmul.f32.gmra.mxu0 %v556
        %v690 = vpop.f32.mrf.mxu0
        %v691 = vadd.f32 0.0, %v690
        %692 = vmatmul.f32.gmra.mxu0 %v559
        %v693 = vpop.f32.mrf.mxu0
        %v694 = vadd.f32 0.0, %v693
        %695 = vmatmul.f32.gmra.mxu0 %v562
        %v696 = vpop.f32.mrf.mxu0
        %v697 = vadd.f32 0.0, %v696
        %698 = vmatmul.f32.gmra.mxu0 %v565
        %v699 = vpop.f32.mrf.mxu0
        %v700 = vadd.f32 0.0, %v699
        %701 = vmatmul.f32.gmra.mxu0 %v568
        %v702 = vpop.f32.mrf.mxu0
        %v703 = vadd.f32 0.0, %v702
        %704 = vmatmul.f32.gmra.mxu0 %v571
        %v705 = vpop.f32.mrf.mxu0
        %v706 = vadd.f32 0.0, %v705
        %707 = vmatmul.f32.gmra.mxu0 %v574
        %v708 = vpop.f32.mrf.mxu0
        %v709 = vadd.f32 0.0, %v708
        %710 = vmatmul.f32.gmra.mxu0 %v577
        %v711 = vpop.f32.mrf.mxu0
        %v712 = vadd.f32 0.0, %v711
        %713 = vmatmul.f32.gmra.mxu0 %v580
        %v714 = vpop.f32.mrf.mxu0
        %v715 = vadd.f32 0.0, %v714
        %716 = vmatmul.f32.gmra.mxu0 %v583
        %v717 = vpop.f32.mrf.mxu0
        %v718 = vadd.f32 0.0, %v717
        %719 = vmatmul.f32.gmra.mxu0 %v586
        %v720 = vpop.f32.mrf.mxu0
        %v721 = vadd.f32 0.0, %v720
        %722 = vdwg.mxu0
        %v723 = vmax.f32 %v611, %v676
        %724 = vmax.xlane.f32.xlu0 %v723
        %v725 = vpop.xlane.xlu0 %724
        %v726 = vmax.f32 %v614, %v679
        %727 = vmax.xlane.f32.xlu0 %v726
        %v728 = vpop.xlane.xlu0 %727
        %v729 = vmax.f32 %v617, %v682
        %730 = vmax.xlane.f32.xlu0 %v729
        %v731 = vpop.xlane.xlu0 %730
        %v732 = vmax.f32 %v620, %v685
        %733 = vmax.xlane.f32.xlu0 %v732
        %v734 = vpop.xlane.xlu0 %733
        %v735 = vmax.f32 %v623, %v688
        %736 = vmax.xlane.f32.xlu0 %v735
        %v737 = vpop.xlane.xlu0 %736
        %v738 = vmax.f32 %v626, %v691
        %739 = vmax.xlane.f32.xlu0 %v738
        %v740 = vpop.xlane.xlu0 %739
        %v741 = vmax.f32 %v629, %v694
        %742 = vmax.xlane.f32.xlu0 %v741
        %v743 = vpop.xlane.xlu0 %742
        %v744 = vmax.f32 %v632, %v697
        %745 = vmax.xlane.f32.xlu0 %v744
        %v746 = vpop.xlane.xlu0 %745
        %v747 = vmax.f32 %v635, %v700
        %748 = vmax.xlane.f32.xlu0 %v747
        %v749 = vpop.xlane.xlu0 %748
        %v750 = vmax.f32 %v638, %v703
        %751 = vmax.xlane.f32.xlu0 %v750
        %v752 = vpop.xlane.xlu0 %751
        %v753 = vmax.f32 %v641, %v706
        %754 = vmax.xlane.f32.xlu0 %v753
        %v755 = vpop.xlane.xlu0 %754
        %v756 = vmax.f32 %v644, %v709
        %757 = vmax.xlane.f32.xlu0 %v756
        %v758 = vpop.xlane.xlu0 %757
        %v759 = vmax.f32 %v647, %v712
        %760 = vmax.xlane.f32.xlu0 %v759
        %v761 = vpop.xlane.xlu0 %760
        %v762 = vmax.f32 %v650, %v715
        %763 = vmax.xlane.f32.xlu0 %v762
        %v764 = vpop.xlane.xlu0 %763
        %v765 = vmax.f32 %v653, %v718
        %766 = vmax.xlane.f32.xlu0 %v765
        %v767 = vpop.xlane.xlu0 %766
        %v768 = vmax.f32 %v656, %v721
        %769 = vmax.xlane.f32.xlu0 %v768
        %v770 = vpop.xlane.xlu0 %769
        %v771 = vsub.f32 %v611, %v725
        %v772 = vsub.f32 %v676, %v725
        %v773 = vsub.f32 %v614, %v728
        %v774 = vsub.f32 %v679, %v728
        %v775 = vsub.f32 %v617, %v731
        %v776 = vsub.f32 %v682, %v731
        %v777 = vsub.f32 %v620, %v734
        %v778 = vsub.f32 %v685, %v734
        %v779 = vsub.f32 %v623, %v737
        %v780 = vsub.f32 %v688, %v737
        %v781 = vsub.f32 %v626, %v740
        %v782 = vsub.f32 %v691, %v740
        %v783 = vsub.f32 %v629, %v743
        %v784 = vsub.f32 %v694, %v743
        %v785 = vsub.f32 %v632, %v746
        %v786 = vsub.f32 %v697, %v746
        %v787 = vsub.f32 %v635, %v749
        %v788 = vsub.f32 %v700, %v749
        %v789 = vsub.f32 %v638, %v752
        %v790 = vsub.f32 %v703, %v752
        %v791 = vsub.f32 %v641, %v755
        %v792 = vsub.f32 %v706, %v755
        %v793 = vsub.f32 %v644, %v758
        %v794 = vsub.f32 %v709, %v758
        %v795 = vsub.f32 %v647, %v761
        %v796 = vsub.f32 %v712, %v761
        %v797 = vsub.f32 %v650, %v764
        %v798 = vsub.f32 %v715, %v764
        %v799 = vsub.f32 %v653, %v767
        %v800 = vsub.f32 %v718, %v767
        %v801 = vsub.f32 %v656, %v770
        %v802 = vsub.f32 %v721, %v770
        %v803 = vmul.f32 %v771, 1.442695
        %v804 = vpow.pop %v803
        %v805 = vmul.f32 %v772, 1.442695
        %v806 = vpow.pop %v805
        %v807 = vmul.f32 %v773, 1.442695
        %v808 = vpow.pop %v807
        %v809 = vmul.f32 %v774, 1.442695
        %v810 = vpow.pop %v809
        %v811 = vmul.f32 %v775, 1.442695
        %v812 = vpow.pop %v811
        %v813 = vmul.f32 %v776, 1.442695
        %v814 = vpow.pop %v813
        %v815 = vmul.f32 %v777, 1.442695
        %v816 = vpow.pop %v815
        %v817 = vmul.f32 %v778, 1.442695
        %v818 = vpow.pop %v817
        %v819 = vmul.f32 %v779, 1.442695
        %v820 = vpow.pop %v819
        %v821 = vmul.f32 %v780, 1.442695
        %v822 = vpow.pop %v821
        %v823 = vmul.f32 %v781, 1.442695
        %v824 = vpow.pop %v823
        %v825 = vmul.f32 %v782, 1.442695
        %v826 = vpow.pop %v825
        %v827 = vmul.f32 %v783, 1.442695
        %v828 = vpow.pop %v827
        %v829 = vmul.f32 %v784, 1.442695
        %v830 = vpow.pop %v829
        %v831 = vmul.f32 %v785, 1.442695
        %v832 = vpow.pop %v831
        %v833 = vmul.f32 %v786, 1.442695
        %v834 = vpow.pop %v833
        %v835 = vmul.f32 %v787, 1.442695
        %v836 = vpow.pop %v835
        %v837 = vmul.f32 %v788, 1.442695
        %v838 = vpow.pop %v837
        %v839 = vmul.f32 %v789, 1.442695
        %v840 = vpow.pop %v839
        %v841 = vmul.f32 %v790, 1.442695
        %v842 = vpow.pop %v841
        %v843 = vmul.f32 %v791, 1.442695
        %v844 = vpow.pop %v843
        %v845 = vmul.f32 %v792, 1.442695
        %v846 = vpow.pop %v845
        %v847 = vmul.f32 %v793, 1.442695
        %v848 = vpow.pop %v847
        %v849 = vmul.f32 %v794, 1.442695
        %v850 = vpow.pop %v849
        %v851 = vmul.f32 %v795, 1.442695
        %v852 = vpow.pop %v851
        %v853 = vmul.f32 %v796, 1.442695
        %v854 = vpow.pop %v853
        %v855 = vmul.f32 %v797, 1.442695
        %v856 = vpow.pop %v855
        %v857 = vmul.f32 %v798, 1.442695
        %v858 = vpow.pop %v857
        %v859 = vmul.f32 %v799, 1.442695
        %v860 = vpow.pop %v859
        %v861 = vmul.f32 %v800, 1.442695
        %v862 = vpow.pop %v861
        %v863 = vmul.f32 %v801, 1.442695
        %v864 = vpow.pop %v863
        %v865 = vmul.f32 %v802, 1.442695
        %v866 = vpow.pop %v865
        %v867 = vadd.f32 %v804, %v806
        %868 = vadd.xlane.f32.xlu0 %v867
        %v869 = vpop.xlane.xlu0 %868
        %v870 = vadd.f32 %v808, %v810
        %871 = vadd.xlane.f32.xlu0 %v870
        %v872 = vpop.xlane.xlu0 %871
        %v873 = vadd.f32 %v812, %v814
        %874 = vadd.xlane.f32.xlu0 %v873
        %v875 = vpop.xlane.xlu0 %874
        %v876 = vadd.f32 %v816, %v818
        %877 = vadd.xlane.f32.xlu0 %v876
        %v878 = vpop.xlane.xlu0 %877
        %v879 = vadd.f32 %v820, %v822
        %880 = vadd.xlane.f32.xlu0 %v879
        %v881 = vpop.xlane.xlu0 %880
        %v882 = vadd.f32 %v824, %v826
        %883 = vadd.xlane.f32.xlu0 %v882
        %v884 = vpop.xlane.xlu0 %883
        %v885 = vadd.f32 %v828, %v830
        %886 = vadd.xlane.f32.xlu0 %v885
        %v887 = vpop.xlane.xlu0 %886
        %v888 = vadd.f32 %v832, %v834
        %889 = vadd.xlane.f32.xlu0 %v888
        %v890 = vpop.xlane.xlu0 %889
        %v891 = vadd.f32 %v836, %v838
        %892 = vadd.xlane.f32.xlu0 %v891
        %v893 = vpop.xlane.xlu0 %892
        %v894 = vadd.f32 %v840, %v842
        %895 = vadd.xlane.f32.xlu0 %v894
        %v896 = vpop.xlane.xlu0 %895
        %v897 = vadd.f32 %v844, %v846
        %898 = vadd.xlane.f32.xlu0 %v897
        %v899 = vpop.xlane.xlu0 %898
        %v900 = vadd.f32 %v848, %v850
        %901 = vadd.xlane.f32.xlu0 %v900
        %v902 = vpop.xlane.xlu0 %901
        %v903 = vadd.f32 %v852, %v854
        %904 = vadd.xlane.f32.xlu0 %v903
        %v905 = vpop.xlane.xlu0 %904
        %v906 = vadd.f32 %v856, %v858
        %907 = vadd.xlane.f32.xlu0 %v906
        %v908 = vpop.xlane.xlu0 %907
        %v909 = vadd.f32 %v860, %v862
        %910 = vadd.xlane.f32.xlu0 %v909
        %v911 = vpop.xlane.xlu0 %910
        %v912 = vadd.f32 %v864, %v866
        %913 = vadd.xlane.f32.xlu0 %v912
        %v914 = vpop.xlane.xlu0 %913
        %v915 = vrcp.pop %v869
        %v916 = vmul.f32 %v869, %v915
        %v917 = vsub.f32 1.0, %v916
        %v918 = vmul.f32 %v915, %v917
        %v919 = vadd.f32 %v915, %v918
        %vm920 = vweird.f32 %v869
        %vm921 = vweird.f32 %v915
        %vm922 = vmor %vm920, %vm921
        %v923 = vsel %vm922, %v915, %v919
        %v924 = vand.u32 2147483647, %v869
        %vm925 = vcmp.eq.f32.partialorder %v924, 8.507059e+37
        %v926 = vand.u32 %v869, 2147483648
        %v927 = vor.u32 1.1754944e-38, %v926
        %v928 = vsel %vm925, %v927, %v923
        %v929 = vrcp.pop %v872
        %v930 = vmul.f32 %v872, %v929
        %v931 = vsub.f32 1.0, %v930
        %v932 = vmul.f32 %v929, %v931
        %v933 = vadd.f32 %v929, %v932
        %vm934 = vweird.f32 %v872
        %vm935 = vweird.f32 %v929
        %vm936 = vmor %vm934, %vm935
        %v937 = vsel %vm936, %v929, %v933
        %v938 = vand.u32 2147483647, %v872
        %vm939 = vcmp.eq.f32.partialorder %v938, 8.507059e+37
        %v940 = vand.u32 %v872, 2147483648
        %v941 = vor.u32 1.1754944e-38, %v940
        %v942 = vsel %vm939, %v941, %v937
        %v943 = vrcp.pop %v875
        %v944 = vmul.f32 %v875, %v943
        %v945 = vsub.f32 1.0, %v944
        %v946 = vmul.f32 %v943, %v945
        %v947 = vadd.f32 %v943, %v946
        %vm948 = vweird.f32 %v875
        %vm949 = vweird.f32 %v943
        %vm950 = vmor %vm948, %vm949
        %v951 = vsel %vm950, %v943, %v947
        %v952 = vand.u32 2147483647, %v875
        %vm953 = vcmp.eq.f32.partialorder %v952, 8.507059e+37
        %v954 = vand.u32 %v875, 2147483648
        %v955 = vor.u32 1.1754944e-38, %v954
        %v956 = vsel %vm953, %v955, %v951
        %v957 = vrcp.pop %v878
        %v958 = vmul.f32 %v878, %v957
        %v959 = vsub.f32 1.0, %v958
        %v960 = vmul.f32 %v957, %v959
        %v961 = vadd.f32 %v957, %v960
        %vm962 = vweird.f32 %v878
        %vm963 = vweird.f32 %v957
        %vm964 = vmor %vm962, %vm963
        %v965 = vsel %vm964, %v957, %v961
        %v966 = vand.u32 2147483647, %v878
        %vm967 = vcmp.eq.f32.partialorder %v966, 8.507059e+37
        %v968 = vand.u32 %v878, 2147483648
        %v969 = vor.u32 1.1754944e-38, %v968
        %v970 = vsel %vm967, %v969, %v965
        %v971 = vrcp.pop %v881
        %v972 = vmul.f32 %v881, %v971
        %v973 = vsub.f32 1.0, %v972
        %v974 = vmul.f32 %v971, %v973
        %v975 = vadd.f32 %v971, %v974
        %vm976 = vweird.f32 %v881
        %vm977 = vweird.f32 %v971
        %vm978 = vmor %vm976, %vm977
        %v979 = vsel %vm978, %v971, %v975
        %v980 = vand.u32 2147483647, %v881
        %vm981 = vcmp.eq.f32.partialorder %v980, 8.507059e+37
        %v982 = vand.u32 %v881, 2147483648
        %v983 = vor.u32 1.1754944e-38, %v982
        %v984 = vsel %vm981, %v983, %v979
        %v985 = vrcp.pop %v884
        %v986 = vmul.f32 %v884, %v985
        %v987 = vsub.f32 1.0, %v986
        %v988 = vmul.f32 %v985, %v987
        %v989 = vadd.f32 %v985, %v988
        %vm990 = vweird.f32 %v884
        %vm991 = vweird.f32 %v985
        %vm992 = vmor %vm990, %vm991
        %v993 = vsel %vm992, %v985, %v989
        %v994 = vand.u32 2147483647, %v884
        %vm995 = vcmp.eq.f32.partialorder %v994, 8.507059e+37
        %v996 = vand.u32 %v884, 2147483648
        %v997 = vor.u32 1.1754944e-38, %v996
        %v998 = vsel %vm995, %v997, %v993
        %v999 = vrcp.pop %v887
        %v1000 = vmul.f32 %v887, %v999
        %v1001 = vsub.f32 1.0, %v1000
        %v1002 = vmul.f32 %v999, %v1001
        %v1003 = vadd.f32 %v999, %v1002
        %vm1004 = vweird.f32 %v887
        %vm1005 = vweird.f32 %v999
        %vm1006 = vmor %vm1004, %vm1005
        %v1007 = vsel %vm1006, %v999, %v1003
        %v1008 = vand.u32 2147483647, %v887
        %vm1009 = vcmp.eq.f32.partialorder %v1008, 8.507059e+37
        %v1010 = vand.u32 %v887, 2147483648
        %v1011 = vor.u32 1.1754944e-38, %v1010
        %v1012 = vsel %vm1009, %v1011, %v1007
        %v1013 = vrcp.pop %v890
        %v1014 = vmul.f32 %v890, %v1013
        %v1015 = vsub.f32 1.0, %v1014
        %v1016 = vmul.f32 %v1013, %v1015
        %v1017 = vadd.f32 %v1013, %v1016
        %vm1018 = vweird.f32 %v890
        %vm1019 = vweird.f32 %v1013
        %vm1020 = vmor %vm1018, %vm1019
        %v1021 = vsel %vm1020, %v1013, %v1017
        %v1022 = vand.u32 2147483647, %v890
        %vm1023 = vcmp.eq.f32.partialorder %v1022, 8.507059e+37
        %v1024 = vand.u32 %v890, 2147483648
        %v1025 = vor.u32 1.1754944e-38, %v1024
        %v1026 = vsel %vm1023, %v1025, %v1021
        %v1027 = vrcp.pop %v893
        %v1028 = vmul.f32 %v893, %v1027
        %v1029 = vsub.f32 1.0, %v1028
        %v1030 = vmul.f32 %v1027, %v1029
        %v1031 = vadd.f32 %v1027, %v1030
        %vm1032 = vweird.f32 %v893
        %vm1033 = vweird.f32 %v1027
        %vm1034 = vmor %vm1032, %vm1033
        %v1035 = vsel %vm1034, %v1027, %v1031
        %v1036 = vand.u32 2147483647, %v893
        %vm1037 = vcmp.eq.f32.partialorder %v1036, 8.507059e+37
        %v1038 = vand.u32 %v893, 2147483648
        %v1039 = vor.u32 1.1754944e-38, %v1038
        %v1040 = vsel %vm1037, %v1039, %v1035
        %v1041 = vrcp.pop %v896
        %v1042 = vmul.f32 %v896, %v1041
        %v1043 = vsub.f32 1.0, %v1042
        %v1044 = vmul.f32 %v1041, %v1043
        %v1045 = vadd.f32 %v1041, %v1044
        %vm1046 = vweird.f32 %v896
        %vm1047 = vweird.f32 %v1041
        %vm1048 = vmor %vm1046, %vm1047
        %v1049 = vsel %vm1048, %v1041, %v1045
        %v1050 = vand.u32 2147483647, %v896
        %vm1051 = vcmp.eq.f32.partialorder %v1050, 8.507059e+37
        %v1052 = vand.u32 %v896, 2147483648
        %v1053 = vor.u32 1.1754944e-38, %v1052
        %v1054 = vsel %vm1051, %v1053, %v1049
        %v1055 = vrcp.pop %v899
        %v1056 = vmul.f32 %v899, %v1055
        %v1057 = vsub.f32 1.0, %v1056
        %v1058 = vmul.f32 %v1055, %v1057
        %v1059 = vadd.f32 %v1055, %v1058
        %vm1060 = vweird.f32 %v899
        %vm1061 = vweird.f32 %v1055
        %vm1062 = vmor %vm1060, %vm1061
        %v1063 = vsel %vm1062, %v1055, %v1059
        %v1064 = vand.u32 2147483647, %v899
        %vm1065 = vcmp.eq.f32.partialorder %v1064, 8.507059e+37
        %v1066 = vand.u32 %v899, 2147483648
        %v1067 = vor.u32 1.1754944e-38, %v1066
        %v1068 = vsel %vm1065, %v1067, %v1063
        %v1069 = vrcp.pop %v902
        %v1070 = vmul.f32 %v902, %v1069
        %v1071 = vsub.f32 1.0, %v1070
        %v1072 = vmul.f32 %v1069, %v1071
        %v1073 = vadd.f32 %v1069, %v1072
        %vm1074 = vweird.f32 %v902
        %vm1075 = vweird.f32 %v1069
        %vm1076 = vmor %vm1074, %vm1075
        %v1077 = vsel %vm1076, %v1069, %v1073
        %v1078 = vand.u32 2147483647, %v902
        %vm1079 = vcmp.eq.f32.partialorder %v1078, 8.507059e+37
        %v1080 = vand.u32 %v902, 2147483648
        %v1081 = vor.u32 1.1754944e-38, %v1080
        %v1082 = vsel %vm1079, %v1081, %v1077
        %v1083 = vrcp.pop %v905
        %v1084 = vmul.f32 %v905, %v1083
        %v1085 = vsub.f32 1.0, %v1084
        %v1086 = vmul.f32 %v1083, %v1085
        %v1087 = vadd.f32 %v1083, %v1086
        %vm1088 = vweird.f32 %v905
        %vm1089 = vweird.f32 %v1083
        %vm1090 = vmor %vm1088, %vm1089
        %v1091 = vsel %vm1090, %v1083, %v1087
        %v1092 = vand.u32 2147483647, %v905
        %vm1093 = vcmp.eq.f32.partialorder %v1092, 8.507059e+37
        %v1094 = vand.u32 %v905, 2147483648
        %v1095 = vor.u32 1.1754944e-38, %v1094
        %v1096 = vsel %vm1093, %v1095, %v1091
        %v1097 = vrcp.pop %v908
        %v1098 = vmul.f32 %v908, %v1097
        %v1099 = vsub.f32 1.0, %v1098
        %v1100 = vmul.f32 %v1097, %v1099
        %v1101 = vadd.f32 %v1097, %v1100
        %vm1102 = vweird.f32 %v908
        %vm1103 = vweird.f32 %v1097
        %vm1104 = vmor %vm1102, %vm1103
        %v1105 = vsel %vm1104, %v1097, %v1101
        %v1106 = vand.u32 2147483647, %v908
        %vm1107 = vcmp.eq.f32.partialorder %v1106, 8.507059e+37
        %v1108 = vand.u32 %v908, 2147483648
        %v1109 = vor.u32 1.1754944e-38, %v1108
        %v1110 = vsel %vm1107, %v1109, %v1105
        %v1111 = vrcp.pop %v911
        %v1112 = vmul.f32 %v911, %v1111
        %v1113 = vsub.f32 1.0, %v1112
        %v1114 = vmul.f32 %v1111, %v1113
        %v1115 = vadd.f32 %v1111, %v1114
        %vm1116 = vweird.f32 %v911
        %vm1117 = vweird.f32 %v1111
        %vm1118 = vmor %vm1116, %vm1117
        %v1119 = vsel %vm1118, %v1111, %v1115
        %v1120 = vand.u32 2147483647, %v911
        %vm1121 = vcmp.eq.f32.partialorder %v1120, 8.507059e+37
        %v1122 = vand.u32 %v911, 2147483648
        %v1123 = vor.u32 1.1754944e-38, %v1122
        %v1124 = vsel %vm1121, %v1123, %v1119
        %v1125 = vrcp.pop %v914
        %v1126 = vmul.f32 %v914, %v1125
        %v1127 = vsub.f32 1.0, %v1126
        %v1128 = vmul.f32 %v1125, %v1127
        %v1129 = vadd.f32 %v1125, %v1128
        %vm1130 = vweird.f32 %v914
        %vm1131 = vweird.f32 %v1125
        %vm1132 = vmor %vm1130, %vm1131
        %v1133 = vsel %vm1132, %v1125, %v1129
        %v1134 = vand.u32 2147483647, %v914
        %vm1135 = vcmp.eq.f32.partialorder %v1134, 8.507059e+37
        %v1136 = vand.u32 %v914, 2147483648
        %v1137 = vor.u32 1.1754944e-38, %v1136
        %v1138 = vsel %vm1135, %v1137, %v1133
        %v1139 = vmul.f32 %v804, %v928
        %v1140 = vmul.f32 %v806, %v928
        %v1141 = vmul.f32 %v808, %v942
        %v1142 = vmul.f32 %v810, %v942
        %v1143 = vmul.f32 %v812, %v956
        %v1144 = vmul.f32 %v814, %v956
        %v1145 = vmul.f32 %v816, %v970
        %v1146 = vmul.f32 %v818, %v970
        %v1147 = vmul.f32 %v820, %v984
        %v1148 = vmul.f32 %v822, %v984
        %v1149 = vmul.f32 %v824, %v998
        %v1150 = vmul.f32 %v826, %v998
        %v1151 = vmul.f32 %v828, %v1012
        %v1152 = vmul.f32 %v830, %v1012
        %v1153 = vmul.f32 %v832, %v1026
        %v1154 = vmul.f32 %v834, %v1026
        %v1155 = vmul.f32 %v836, %v1040
        %v1156 = vmul.f32 %v838, %v1040
        %v1157 = vmul.f32 %v840, %v1054
        %v1158 = vmul.f32 %v842, %v1054
        %v1159 = vmul.f32 %v844, %v1068
        %v1160 = vmul.f32 %v846, %v1068
        %v1161 = vmul.f32 %v848, %v1082
        %v1162 = vmul.f32 %v850, %v1082
        %v1163 = vmul.f32 %v852, %v1096
        %v1164 = vmul.f32 %v854, %v1096
        %v1165 = vmul.f32 %v856, %v1110
        %v1166 = vmul.f32 %v858, %v1110
        %v1167 = vmul.f32 %v860, %v1124
        %v1168 = vmul.f32 %v862, %v1124
        %v1169 = vmul.f32 %v864, %v1138
        %v1170 = vmul.f32 %v866, %v1138
        %1171 = vst [vmem:[%s327] sm:$0xff] %v1139
        %1172 = vst [vmem:[%s327 + $0x8] sm:$0xff] %v1140
        %1173 = vst [vmem:[%s327 + $0x10] sm:$0xff] %v1141
        %1174 = vst [vmem:[%s327 + $0x18] sm:$0xff] %v1142
        %1175 = vst [vmem:[%s327 + $0x20] sm:$0xff] %v1143
        %1176 = vst [vmem:[%s327 + $0x28] sm:$0xff] %v1144
        %1177 = vst [vmem:[%s327 + $0x30] sm:$0xff] %v1145
        %1178 = vst [vmem:[%s327 + $0x38] sm:$0xff] %v1146
        %1179 = vst [vmem:[%s327 + $0x40] sm:$0xff] %v1147
        %1180 = vst [vmem:[%s327 + $0x48] sm:$0xff] %v1148
        %1181 = vst [vmem:[%s327 + $0x50] sm:$0xff] %v1149
        %1182 = vst [vmem:[%s327 + $0x58] sm:$0xff] %v1150
        %1183 = vst [vmem:[%s327 + $0x60] sm:$0xff] %v1151
        %1184 = vst [vmem:[%s327 + $0x68] sm:$0xff] %v1152
        %1185 = vst [vmem:[%s327 + $0x70] sm:$0xff] %v1153
        %1186 = vst [vmem:[%s327 + $0x78] sm:$0xff] %v1154
        %1187 = vst [vmem:[%s327 + $0x80] sm:$0xff] %v1155
        %1188 = vst [vmem:[%s327 + $0x88] sm:$0xff] %v1156
        %1189 = vst [vmem:[%s327 + $0x90] sm:$0xff] %v1157
        %1190 = vst [vmem:[%s327 + $0x98] sm:$0xff] %v1158
        %1191 = vst [vmem:[%s327 + $0xa0] sm:$0xff] %v1159
        %1192 = vst [vmem:[%s327 + $0xa8] sm:$0xff] %v1160
        %1193 = vst [vmem:[%s327 + $0xb0] sm:$0xff] %v1161
        %1194 = vst [vmem:[%s327 + $0xb8] sm:$0xff] %v1162
        %1195 = vst [vmem:[%s327 + $0xc0] sm:$0xff] %v1163
        %1196 = vst [vmem:[%s327 + $0xc8] sm:$0xff] %v1164
        %1197 = vst [vmem:[%s327 + $0xd0] sm:$0xff] %v1165
        %1198 = vst [vmem:[%s327 + $0xd8] sm:$0xff] %v1166
        %1199 = vst [vmem:[%s327 + $0xe0] sm:$0xff] %v1167
        %1200 = vst [vmem:[%s327 + $0xe8] sm:$0xff] %v1168
        %1201 = vst [vmem:[%s327 + $0xf0] sm:$0xff] %v1169
        %1202 = vst [vmem:[%s327 + $0xf8] sm:$0xff] %v1170
        %1203 = vxpose.xlu0.b32.start [1/16] %v497, 128
        %1204 = vxpose.xlu0.b32.cont [2/16] %v498, 128
        %1205 = vxpose.xlu0.b32.cont [3/16] 0.0, 128
        %1206 = vxpose.xlu0.b32.cont [4/16] 0.0, 128
        %1207 = vxpose.xlu0.b32.cont [5/16] 0.0, 128
        %1208 = vxpose.xlu0.b32.cont [6/16] 0.0, 128
        %1209 = vxpose.xlu0.b32.cont [7/16] 0.0, 128
        %1210 = vxpose.xlu0.b32.cont [8/16] 0.0, 128
        %1211 = vxpose.xlu0.b32.cont [9/16] 0.0, 128
        %1212 = vxpose.xlu0.b32.cont [10/16] 0.0, 128
        %1213 = vxpose.xlu0.b32.cont [11/16] 0.0, 128
        %1214 = vxpose.xlu0.b32.cont [12/16] 0.0, 128
        %1215 = vxpose.xlu0.b32.cont [13/16] 0.0, 128
        %1216 = vxpose.xlu0.b32.cont [14/16] 0.0, 128
        %1217 = vxpose.xlu0.b32.cont [15/16] 0.0, 128
        %1218 = vxpose.xlu0.b32.end [16/16] 0.0, 128
        %v1219 = vpop.trf.xlu0
        %v1220 = vpop.trf.xlu0
        %v1221 = vpop.trf.xlu0
        %v1222 = vpop.trf.xlu0
        %v1223 = vpop.trf.xlu0
        %v1224 = vpop.trf.xlu0
        %v1225 = vpop.trf.xlu0
        %v1226 = vpop.trf.xlu0
        %v1227 = vpop.trf.xlu0
        %v1228 = vpop.trf.xlu0
        %v1229 = vpop.trf.xlu0
        %v1230 = vpop.trf.xlu0
        %v1231 = vpop.trf.xlu0
        %v1232 = vpop.trf.xlu0
        %v1233 = vpop.trf.xlu0
        %v1234 = vpop.trf.xlu0
        %vm1235 = vcmask 130048
        %v1237 = vsel %vm1235, %v1219, 0
        %v1240 = vsel %vm1235, %v1220, 0
        %v1243 = vsel %vm1235, %v1221, 0
        %v1246 = vsel %vm1235, %v1222, 0
        %v1249 = vsel %vm1235, %v1223, 0
        %v1252 = vsel %vm1235, %v1224, 0
        %v1255 = vsel %vm1235, %v1225, 0
        %v1258 = vsel %vm1235, %v1226, 0
        %v1261 = vsel %vm1235, %v1227, 0
        %v1264 = vsel %vm1235, %v1228, 0
        %v1267 = vsel %vm1235, %v1229, 0
        %v1270 = vsel %vm1235, %v1230, 0
        %v1273 = vsel %vm1235, %v1231, 0
        %v1276 = vsel %vm1235, %v1232, 0
        %v1279 = vsel %vm1235, %v1233, 0
        %v1282 = vsel %vm1235, %v1234, 0
        %1284 = vmatpush.msra.mxu0 0.0
        %1285 = vmatpush.msra.mxu0 0.0
        %1286 = vmatpush.msra.mxu0 0.0
        %1287 = vmatpush.msra.mxu0 0.0
        %1288 = vmatpush.msra.mxu0 0.0
        %1289 = vmatpush.msra.mxu0 0.0
        %1290 = vmatpush.msra.mxu0 0.0
        %1291 = vmatpush.msra.mxu0 0.0
        %1292 = vmatpush.msra.mxu0 0.0
        %1293 = vmatpush.msra.mxu0 0.0
        %1294 = vmatpush.msra.mxu0 0.0
        %1295 = vmatpush.msra.mxu0 0.0
        %1296 = vmatpush.msra.mxu0 0.0
        %1297 = vmatpush.msra.mxu0 0.0
        %1298 = vmatpush.msra.mxu0 %v493
        %1299 = vmatpush.msra.mxu0 %v491
        %1300 = vmatmul.f32.gmra.mxu0 %v1237
        %v1301 = vpop.f32.mrf.mxu0
        %v1302 = vadd.f32 0.0, %v1301
        %1303 = vmatmul.f32.gmra.mxu0 %v1240
        %v1304 = vpop.f32.mrf.mxu0
        %v1305 = vadd.f32 0.0, %v1304
        %1306 = vmatmul.f32.gmra.mxu0 %v1243
        %v1307 = vpop.f32.mrf.mxu0
        %v1308 = vadd.f32 0.0, %v1307
        %1309 = vmatmul.f32.gmra.mxu0 %v1246
        %v1310 = vpop.f32.mrf.mxu0
        %v1311 = vadd.f32 0.0, %v1310
        %1312 = vmatmul.f32.gmra.mxu0 %v1249
        %v1313 = vpop.f32.mrf.mxu0
        %v1314 = vadd.f32 0.0, %v1313
        %1315 = vmatmul.f32.gmra.mxu0 %v1252
        %v1316 = vpop.f32.mrf.mxu0
        %v1317 = vadd.f32 0.0, %v1316
        %1318 = vmatmul.f32.gmra.mxu0 %v1255
        %v1319 = vpop.f32.mrf.mxu0
        %v1320 = vadd.f32 0.0, %v1319
        %1321 = vmatmul.f32.gmra.mxu0 %v1258
        %v1322 = vpop.f32.mrf.mxu0
        %v1323 = vadd.f32 0.0, %v1322
        %1324 = vmatmul.f32.gmra.mxu0 %v1261
        %v1325 = vpop.f32.mrf.mxu0
        %v1326 = vadd.f32 0.0, %v1325
        %1327 = vmatmul.f32.gmra.mxu0 %v1264
        %v1328 = vpop.f32.mrf.mxu0
        %v1329 = vadd.f32 0.0, %v1328
        %1330 = vmatmul.f32.gmra.mxu0 %v1267
        %v1331 = vpop.f32.mrf.mxu0
        %v1332 = vadd.f32 0.0, %v1331
        %1333 = vmatmul.f32.gmra.mxu0 %v1270
        %v1334 = vpop.f32.mrf.mxu0
        %v1335 = vadd.f32 0.0, %v1334
        %1336 = vmatmul.f32.gmra.mxu0 %v1273
        %v1337 = vpop.f32.mrf.mxu0
        %v1338 = vadd.f32 0.0, %v1337
        %1339 = vmatmul.f32.gmra.mxu0 %v1276
        %v1340 = vpop.f32.mrf.mxu0
        %v1341 = vadd.f32 0.0, %v1340
        %1342 = vmatmul.f32.gmra.mxu0 %v1279
        %v1343 = vpop.f32.mrf.mxu0
        %v1344 = vadd.f32 0.0, %v1343
        %1345 = vmatmul.f32.gmra.mxu0 %v1282
        %v1346 = vpop.f32.mrf.mxu0
        %v1347 = vadd.f32 0.0, %v1346
        %1348 = vdwg.mxu0
        %1349 = vmatpush.msra.mxu0 0.0
        %1350 = vmatpush.msra.mxu0 0.0
        %1351 = vmatpush.msra.mxu0 0.0
        %1352 = vmatpush.msra.mxu0 0.0
        %1353 = vmatpush.msra.mxu0 0.0
        %1354 = vmatpush.msra.mxu0 0.0
        %1355 = vmatpush.msra.mxu0 0.0
        %1356 = vmatpush.msra.mxu0 0.0
        %1357 = vmatpush.msra.mxu0 0.0
        %1358 = vmatpush.msra.mxu0 0.0
        %1359 = vmatpush.msra.mxu0 0.0
        %1360 = vmatpush.msra.mxu0 0.0
        %1361 = vmatpush.msra.mxu0 0.0
        %1362 = vmatpush.msra.mxu0 0.0
        %1363 = vmatpush.msra.mxu0 %v494
        %1364 = vmatpush.msra.mxu0 %v492
        %1365 = vmatmul.f32.gmra.mxu0 %v1237
        %v1366 = vpop.f32.mrf.mxu0
        %v1367 = vadd.f32 0.0, %v1366
        %1368 = vmatmul.f32.gmra.mxu0 %v1240
        %v1369 = vpop.f32.mrf.mxu0
        %v1370 = vadd.f32 0.0, %v1369
        %1371 = vmatmul.f32.gmra.mxu0 %v1243
        %v1372 = vpop.f32.mrf.mxu0
        %v1373 = vadd.f32 0.0, %v1372
        %1374 = vmatmul.f32.gmra.mxu0 %v1246
        %v1375 = vpop.f32.mrf.mxu0
        %v1376 = vadd.f32 0.0, %v1375
        %1377 = vmatmul.f32.gmra.mxu0 %v1249
        %v1378 = vpop.f32.mrf.mxu0
        %v1379 = vadd.f32 0.0, %v1378
        %1380 = vmatmul.f32.gmra.mxu0 %v1252
        %v1381 = vpop.f32.mrf.mxu0
        %v1382 = vadd.f32 0.0, %v1381
        %1383 = vmatmul.f32.gmra.mxu0 %v1255
        %v1384 = vpop.f32.mrf.mxu0
        %v1385 = vadd.f32 0.0, %v1384
        %1386 = vmatmul.f32.gmra.mxu0 %v1258
        %v1387 = vpop.f32.mrf.mxu0
        %v1388 = vadd.f32 0.0, %v1387
        %1389 = vmatmul.f32.gmra.mxu0 %v1261
        %v1390 = vpop.f32.mrf.mxu0
        %v1391 = vadd.f32 0.0, %v1390
        %1392 = vmatmul.f32.gmra.mxu0 %v1264
        %v1393 = vpop.f32.mrf.mxu0
        %v1394 = vadd.f32 0.0, %v1393
        %1395 = vmatmul.f32.gmra.mxu0 %v1267
        %v1396 = vpop.f32.mrf.mxu0
        %v1397 = vadd.f32 0.0, %v1396
        %1398 = vmatmul.f32.gmra.mxu0 %v1270
        %v1399 = vpop.f32.mrf.mxu0
        %v1400 = vadd.f32 0.0, %v1399
        %1401 = vmatmul.f32.gmra.mxu0 %v1273
        %v1402 = vpop.f32.mrf.mxu0
        %v1403 = vadd.f32 0.0, %v1402
        %1404 = vmatmul.f32.gmra.mxu0 %v1276
        %v1405 = vpop.f32.mrf.mxu0
        %v1406 = vadd.f32 0.0, %v1405
        %1407 = vmatmul.f32.gmra.mxu0 %v1279
        %v1408 = vpop.f32.mrf.mxu0
        %v1409 = vadd.f32 0.0, %v1408
        %1410 = vmatmul.f32.gmra.mxu0 %v1282
        %v1411 = vpop.f32.mrf.mxu0
        %v1412 = vadd.f32 0.0, %v1411
        %1413 = vdwg.mxu0
        %v1414 = vmax.f32 %v1302, %v1367
        %1415 = vmax.xlane.f32.xlu0 %v1414
        %v1416 = vpop.xlane.xlu0 %1415
        %v1417 = vmax.f32 %v1305, %v1370
        %1418 = vmax.xlane.f32.xlu0 %v1417
        %v1419 = vpop.xlane.xlu0 %1418
        %v1420 = vmax.f32 %v1308, %v1373
        %1421 = vmax.xlane.f32.xlu0 %v1420
        %v1422 = vpop.xlane.xlu0 %1421
        %v1423 = vmax.f32 %v1311, %v1376
        %1424 = vmax.xlane.f32.xlu0 %v1423
        %v1425 = vpop.xlane.xlu0 %1424
        %v1426 = vmax.f32 %v1314, %v1379
        %1427 = vmax.xlane.f32.xlu0 %v1426
        %v1428 = vpop.xlane.xlu0 %1427
        %v1429 = vmax.f32 %v1317, %v1382
        %1430 = vmax.xlane.f32.xlu0 %v1429
        %v1431 = vpop.xlane.xlu0 %1430
        %v1432 = vmax.f32 %v1320, %v1385
        %1433 = vmax.xlane.f32.xlu0 %v1432
        %v1434 = vpop.xlane.xlu0 %1433
        %v1435 = vmax.f32 %v1323, %v1388
        %1436 = vmax.xlane.f32.xlu0 %v1435
        %v1437 = vpop.xlane.xlu0 %1436
        %v1438 = vmax.f32 %v1326, %v1391
        %1439 = vmax.xlane.f32.xlu0 %v1438
        %v1440 = vpop.xlane.xlu0 %1439
        %v1441 = vmax.f32 %v1329, %v1394
        %1442 = vmax.xlane.f32.xlu0 %v1441
        %v1443 = vpop.xlane.xlu0 %1442
        %v1444 = vmax.f32 %v1332, %v1397
        %1445 = vmax.xlane.f32.xlu0 %v1444
        %v1446 = vpop.xlane.xlu0 %1445
        %v1447 = vmax.f32 %v1335, %v1400
        %1448 = vmax.xlane.f32.xlu0 %v1447
        %v1449 = vpop.xlane.xlu0 %1448
        %v1450 = vmax.f32 %v1338, %v1403
        %1451 = vmax.xlane.f32.xlu0 %v1450
        %v1452 = vpop.xlane.xlu0 %1451
        %v1453 = vmax.f32 %v1341, %v1406
        %1454 = vmax.xlane.f32.xlu0 %v1453
        %v1455 = vpop.xlane.xlu0 %1454
        %v1456 = vmax.f32 %v1344, %v1409
        %1457 = vmax.xlane.f32.xlu0 %v1456
        %v1458 = vpop.xlane.xlu0 %1457
        %v1459 = vmax.f32 %v1347, %v1412
        %1460 = vmax.xlane.f32.xlu0 %v1459
        %v1461 = vpop.xlane.xlu0 %1460
        %v1462 = vsub.f32 %v1302, %v1416
        %v1463 = vsub.f32 %v1367, %v1416
        %v1464 = vsub.f32 %v1305, %v1419
        %v1465 = vsub.f32 %v1370, %v1419
        %v1466 = vsub.f32 %v1308, %v1422
        %v1467 = vsub.f32 %v1373, %v1422
        %v1468 = vsub.f32 %v1311, %v1425
        %v1469 = vsub.f32 %v1376, %v1425
        %v1470 = vsub.f32 %v1314, %v1428
        %v1471 = vsub.f32 %v1379, %v1428
        %v1472 = vsub.f32 %v1317, %v1431
        %v1473 = vsub.f32 %v1382, %v1431
        %v1474 = vsub.f32 %v1320, %v1434
        %v1475 = vsub.f32 %v1385, %v1434
        %v1476 = vsub.f32 %v1323, %v1437
        %v1477 = vsub.f32 %v1388, %v1437
        %v1478 = vsub.f32 %v1326, %v1440
        %v1479 = vsub.f32 %v1391, %v1440
        %v1480 = vsub.f32 %v1329, %v1443
        %v1481 = vsub.f32 %v1394, %v1443
        %v1482 = vsub.f32 %v1332, %v1446
        %v1483 = vsub.f32 %v1397, %v1446
        %v1484 = vsub.f32 %v1335, %v1449
        %v1485 = vsub.f32 %v1400, %v1449
        %v1486 = vsub.f32 %v1338, %v1452
        %v1487 = vsub.f32 %v1403, %v1452
        %v1488 = vsub.f32 %v1341, %v1455
        %v1489 = vsub.f32 %v1406, %v1455
        %v1490 = vsub.f32 %v1344, %v1458
        %v1491 = vsub.f32 %v1409, %v1458
        %v1492 = vsub.f32 %v1347, %v1461
        %v1493 = vsub.f32 %v1412, %v1461
        %v1494 = vmul.f32 %v1462, 1.442695
        %v1495 = vpow.pop %v1494
        %v1496 = vmul.f32 %v1463, 1.442695
        %v1497 = vpow.pop %v1496
        %v1498 = vmul.f32 %v1464, 1.442695
        %v1499 = vpow.pop %v1498
        %v1500 = vmul.f32 %v1465, 1.442695
        %v1501 = vpow.pop %v1500
        %v1502 = vmul.f32 %v1466, 1.442695
        %v1503 = vpow.pop %v1502
        %v1504 = vmul.f32 %v1467, 1.442695
        %v1505 = vpow.pop %v1504
        %v1506 = vmul.f32 %v1468, 1.442695
        %v1507 = vpow.pop %v1506
        %v1508 = vmul.f32 %v1469, 1.442695
        %v1509 = vpow.pop %v1508
        %v1510 = vmul.f32 %v1470, 1.442695
        %v1511 = vpow.pop %v1510
        %v1512 = vmul.f32 %v1471, 1.442695
        %v1513 = vpow.pop %v1512
        %v1514 = vmul.f32 %v1472, 1.442695
        %v1515 = vpow.pop %v1514
        %v1516 = vmul.f32 %v1473, 1.442695
        %v1517 = vpow.pop %v1516
        %v1518 = vmul.f32 %v1474, 1.442695
        %v1519 = vpow.pop %v1518
        %v1520 = vmul.f32 %v1475, 1.442695
        %v1521 = vpow.pop %v1520
        %v1522 = vmul.f32 %v1476, 1.442695
        %v1523 = vpow.pop %v1522
        %v1524 = vmul.f32 %v1477, 1.442695
        %v1525 = vpow.pop %v1524
        %v1526 = vmul.f32 %v1478, 1.442695
        %v1527 = vpow.pop %v1526
        %v1528 = vmul.f32 %v1479, 1.442695
        %v1529 = vpow.pop %v1528
        %v1530 = vmul.f32 %v1480, 1.442695
        %v1531 = vpow.pop %v1530
        %v1532 = vmul.f32 %v1481, 1.442695
        %v1533 = vpow.pop %v1532
        %v1534 = vmul.f32 %v1482, 1.442695
        %v1535 = vpow.pop %v1534
        %v1536 = vmul.f32 %v1483, 1.442695
        %v1537 = vpow.pop %v1536
        %v1538 = vmul.f32 %v1484, 1.442695
        %v1539 = vpow.pop %v1538
        %v1540 = vmul.f32 %v1485, 1.442695
        %v1541 = vpow.pop %v1540
        %v1542 = vmul.f32 %v1486, 1.442695
        %v1543 = vpow.pop %v1542
        %v1544 = vmul.f32 %v1487, 1.442695
        %v1545 = vpow.pop %v1544
        %v1546 = vmul.f32 %v1488, 1.442695
        %v1547 = vpow.pop %v1546
        %v1548 = vmul.f32 %v1489, 1.442695
        %v1549 = vpow.pop %v1548
        %v1550 = vmul.f32 %v1490, 1.442695
        %v1551 = vpow.pop %v1550
        %v1552 = vmul.f32 %v1491, 1.442695
        %v1553 = vpow.pop %v1552
        %v1554 = vmul.f32 %v1492, 1.442695
        %v1555 = vpow.pop %v1554
        %v1556 = vmul.f32 %v1493, 1.442695
        %v1557 = vpow.pop %v1556
        %v1558 = vadd.f32 %v1495, %v1497
        %1559 = vadd.xlane.f32.xlu0 %v1558
        %v1560 = vpop.xlane.xlu0 %1559
        %v1561 = vadd.f32 %v1499, %v1501
        %1562 = vadd.xlane.f32.xlu0 %v1561
        %v1563 = vpop.xlane.xlu0 %1562
        %v1564 = vadd.f32 %v1503, %v1505
        %1565 = vadd.xlane.f32.xlu0 %v1564
        %v1566 = vpop.xlane.xlu0 %1565
        %v1567 = vadd.f32 %v1507, %v1509
        %1568 = vadd.xlane.f32.xlu0 %v1567
        %v1569 = vpop.xlane.xlu0 %1568
        %v1570 = vadd.f32 %v1511, %v1513
        %1571 = vadd.xlane.f32.xlu0 %v1570
        %v1572 = vpop.xlane.xlu0 %1571
        %v1573 = vadd.f32 %v1515, %v1517
        %1574 = vadd.xlane.f32.xlu0 %v1573
        %v1575 = vpop.xlane.xlu0 %1574
        %v1576 = vadd.f32 %v1519, %v1521
        %1577 = vadd.xlane.f32.xlu0 %v1576
        %v1578 = vpop.xlane.xlu0 %1577
        %v1579 = vadd.f32 %v1523, %v1525
        %1580 = vadd.xlane.f32.xlu0 %v1579
        %v1581 = vpop.xlane.xlu0 %1580
        %v1582 = vadd.f32 %v1527, %v1529
        %1583 = vadd.xlane.f32.xlu0 %v1582
        %v1584 = vpop.xlane.xlu0 %1583
        %v1585 = vadd.f32 %v1531, %v1533
        %1586 = vadd.xlane.f32.xlu0 %v1585
        %v1587 = vpop.xlane.xlu0 %1586
        %v1588 = vadd.f32 %v1535, %v1537
        %1589 = vadd.xlane.f32.xlu0 %v1588
        %v1590 = vpop.xlane.xlu0 %1589
        %v1591 = vadd.f32 %v1539, %v1541
        %1592 = vadd.xlane.f32.xlu0 %v1591
        %v1593 = vpop.xlane.xlu0 %1592
        %v1594 = vadd.f32 %v1543, %v1545
        %1595 = vadd.xlane.f32.xlu0 %v1594
        %v1596 = vpop.xlane.xlu0 %1595
        %v1597 = vadd.f32 %v1547, %v1549
        %1598 = vadd.xlane.f32.xlu0 %v1597
        %v1599 = vpop.xlane.xlu0 %1598
        %v1600 = vadd.f32 %v1551, %v1553
        %1601 = vadd.xlane.f32.xlu0 %v1600
        %v1602 = vpop.xlane.xlu0 %1601
        %v1603 = vadd.f32 %v1555, %v1557
        %1604 = vadd.xlane.f32.xlu0 %v1603
        %v1605 = vpop.xlane.xlu0 %1604
        %v1606 = vrcp.pop %v1560
        %v1607 = vmul.f32 %v1560, %v1606
        %v1608 = vsub.f32 1.0, %v1607
        %v1609 = vmul.f32 %v1606, %v1608
        %v1610 = vadd.f32 %v1606, %v1609
        %vm1611 = vweird.f32 %v1560
        %vm1612 = vweird.f32 %v1606
        %vm1613 = vmor %vm1611, %vm1612
        %v1614 = vsel %vm1613, %v1606, %v1610
        %v1615 = vand.u32 2147483647, %v1560
        %vm1616 = vcmp.eq.f32.partialorder %v1615, 8.507059e+37
        %v1617 = vand.u32 %v1560, 2147483648
        %v1618 = vor.u32 1.1754944e-38, %v1617
        %v1619 = vsel %vm1616, %v1618, %v1614
        %v1620 = vrcp.pop %v1563
        %v1621 = vmul.f32 %v1563, %v1620
        %v1622 = vsub.f32 1.0, %v1621
        %v1623 = vmul.f32 %v1620, %v1622
        %v1624 = vadd.f32 %v1620, %v1623
        %vm1625 = vweird.f32 %v1563
        %vm1626 = vweird.f32 %v1620
        %vm1627 = vmor %vm1625, %vm1626
        %v1628 = vsel %vm1627, %v1620, %v1624
        %v1629 = vand.u32 2147483647, %v1563
        %vm1630 = vcmp.eq.f32.partialorder %v1629, 8.507059e+37
        %v1631 = vand.u32 %v1563, 2147483648
        %v1632 = vor.u32 1.1754944e-38, %v1631
        %v1633 = vsel %vm1630, %v1632, %v1628
        %v1634 = vrcp.pop %v1566
        %v1635 = vmul.f32 %v1566, %v1634
        %v1636 = vsub.f32 1.0, %v1635
        %v1637 = vmul.f32 %v1634, %v1636
        %v1638 = vadd.f32 %v1634, %v1637
        %vm1639 = vweird.f32 %v1566
        %vm1640 = vweird.f32 %v1634
        %vm1641 = vmor %vm1639, %vm1640
        %v1642 = vsel %vm1641, %v1634, %v1638
        %v1643 = vand.u32 2147483647, %v1566
        %vm1644 = vcmp.eq.f32.partialorder %v1643, 8.507059e+37
        %v1645 = vand.u32 %v1566, 2147483648
        %v1646 = vor.u32 1.1754944e-38, %v1645
        %v1647 = vsel %vm1644, %v1646, %v1642
        %v1648 = vrcp.pop %v1569
        %v1649 = vmul.f32 %v1569, %v1648
        %v1650 = vsub.f32 1.0, %v1649
        %v1651 = vmul.f32 %v1648, %v1650
        %v1652 = vadd.f32 %v1648, %v1651
        %vm1653 = vweird.f32 %v1569
        %vm1654 = vweird.f32 %v1648
        %vm1655 = vmor %vm1653, %vm1654
        %v1656 = vsel %vm1655, %v1648, %v1652
        %v1657 = vand.u32 2147483647, %v1569
        %vm1658 = vcmp.eq.f32.partialorder %v1657, 8.507059e+37
        %v1659 = vand.u32 %v1569, 2147483648
        %v1660 = vor.u32 1.1754944e-38, %v1659
        %v1661 = vsel %vm1658, %v1660, %v1656
        %v1662 = vrcp.pop %v1572
        %v1663 = vmul.f32 %v1572, %v1662
        %v1664 = vsub.f32 1.0, %v1663
        %v1665 = vmul.f32 %v1662, %v1664
        %v1666 = vadd.f32 %v1662, %v1665
        %vm1667 = vweird.f32 %v1572
        %vm1668 = vweird.f32 %v1662
        %vm1669 = vmor %vm1667, %vm1668
        %v1670 = vsel %vm1669, %v1662, %v1666
        %v1671 = vand.u32 2147483647, %v1572
        %vm1672 = vcmp.eq.f32.partialorder %v1671, 8.507059e+37
        %v1673 = vand.u32 %v1572, 2147483648
        %v1674 = vor.u32 1.1754944e-38, %v1673
        %v1675 = vsel %vm1672, %v1674, %v1670
        %v1676 = vrcp.pop %v1575
        %v1677 = vmul.f32 %v1575, %v1676
        %v1678 = vsub.f32 1.0, %v1677
        %v1679 = vmul.f32 %v1676, %v1678
        %v1680 = vadd.f32 %v1676, %v1679
        %vm1681 = vweird.f32 %v1575
        %vm1682 = vweird.f32 %v1676
        %vm1683 = vmor %vm1681, %vm1682
        %v1684 = vsel %vm1683, %v1676, %v1680
        %v1685 = vand.u32 2147483647, %v1575
        %vm1686 = vcmp.eq.f32.partialorder %v1685, 8.507059e+37
        %v1687 = vand.u32 %v1575, 2147483648
        %v1688 = vor.u32 1.1754944e-38, %v1687
        %v1689 = vsel %vm1686, %v1688, %v1684
        %v1690 = vrcp.pop %v1578
        %v1691 = vmul.f32 %v1578, %v1690
        %v1692 = vsub.f32 1.0, %v1691
        %v1693 = vmul.f32 %v1690, %v1692
        %v1694 = vadd.f32 %v1690, %v1693
        %vm1695 = vweird.f32 %v1578
        %vm1696 = vweird.f32 %v1690
        %vm1697 = vmor %vm1695, %vm1696
        %v1698 = vsel %vm1697, %v1690, %v1694
        %v1699 = vand.u32 2147483647, %v1578
        %vm1700 = vcmp.eq.f32.partialorder %v1699, 8.507059e+37
        %v1701 = vand.u32 %v1578, 2147483648
        %v1702 = vor.u32 1.1754944e-38, %v1701
        %v1703 = vsel %vm1700, %v1702, %v1698
        %v1704 = vrcp.pop %v1581
        %v1705 = vmul.f32 %v1581, %v1704
        %v1706 = vsub.f32 1.0, %v1705
        %v1707 = vmul.f32 %v1704, %v1706
        %v1708 = vadd.f32 %v1704, %v1707
        %vm1709 = vweird.f32 %v1581
        %vm1710 = vweird.f32 %v1704
        %vm1711 = vmor %vm1709, %vm1710
        %v1712 = vsel %vm1711, %v1704, %v1708
        %v1713 = vand.u32 2147483647, %v1581
        %vm1714 = vcmp.eq.f32.partialorder %v1713, 8.507059e+37
        %v1715 = vand.u32 %v1581, 2147483648
        %v1716 = vor.u32 1.1754944e-38, %v1715
        %v1717 = vsel %vm1714, %v1716, %v1712
        %v1718 = vrcp.pop %v1584
        %v1719 = vmul.f32 %v1584, %v1718
        %v1720 = vsub.f32 1.0, %v1719
        %v1721 = vmul.f32 %v1718, %v1720
        %v1722 = vadd.f32 %v1718, %v1721
        %vm1723 = vweird.f32 %v1584
        %vm1724 = vweird.f32 %v1718
        %vm1725 = vmor %vm1723, %vm1724
        %v1726 = vsel %vm1725, %v1718, %v1722
        %v1727 = vand.u32 2147483647, %v1584
        %vm1728 = vcmp.eq.f32.partialorder %v1727, 8.507059e+37
        %v1729 = vand.u32 %v1584, 2147483648
        %v1730 = vor.u32 1.1754944e-38, %v1729
        %v1731 = vsel %vm1728, %v1730, %v1726
        %v1732 = vrcp.pop %v1587
        %v1733 = vmul.f32 %v1587, %v1732
        %v1734 = vsub.f32 1.0, %v1733
        %v1735 = vmul.f32 %v1732, %v1734
        %v1736 = vadd.f32 %v1732, %v1735
        %vm1737 = vweird.f32 %v1587
        %vm1738 = vweird.f32 %v1732
        %vm1739 = vmor %vm1737, %vm1738
        %v1740 = vsel %vm1739, %v1732, %v1736
        %v1741 = vand.u32 2147483647, %v1587
        %vm1742 = vcmp.eq.f32.partialorder %v1741, 8.507059e+37
        %v1743 = vand.u32 %v1587, 2147483648
        %v1744 = vor.u32 1.1754944e-38, %v1743
        %v1745 = vsel %vm1742, %v1744, %v1740
        %v1746 = vrcp.pop %v1590
        %v1747 = vmul.f32 %v1590, %v1746
        %v1748 = vsub.f32 1.0, %v1747
        %v1749 = vmul.f32 %v1746, %v1748
        %v1750 = vadd.f32 %v1746, %v1749
        %vm1751 = vweird.f32 %v1590
        %vm1752 = vweird.f32 %v1746
        %vm1753 = vmor %vm1751, %vm1752
        %v1754 = vsel %vm1753, %v1746, %v1750
        %v1755 = vand.u32 2147483647, %v1590
        %vm1756 = vcmp.eq.f32.partialorder %v1755, 8.507059e+37
        %v1757 = vand.u32 %v1590, 2147483648
        %v1758 = vor.u32 1.1754944e-38, %v1757
        %v1759 = vsel %vm1756, %v1758, %v1754
        %v1760 = vrcp.pop %v1593
        %v1761 = vmul.f32 %v1593, %v1760
        %v1762 = vsub.f32 1.0, %v1761
        %v1763 = vmul.f32 %v1760, %v1762
        %v1764 = vadd.f32 %v1760, %v1763
        %vm1765 = vweird.f32 %v1593
        %vm1766 = vweird.f32 %v1760
        %vm1767 = vmor %vm1765, %vm1766
        %v1768 = vsel %vm1767, %v1760, %v1764
        %v1769 = vand.u32 2147483647, %v1593
        %vm1770 = vcmp.eq.f32.partialorder %v1769, 8.507059e+37
        %v1771 = vand.u32 %v1593, 2147483648
        %v1772 = vor.u32 1.1754944e-38, %v1771
        %v1773 = vsel %vm1770, %v1772, %v1768
        %v1774 = vrcp.pop %v1596
        %v1775 = vmul.f32 %v1596, %v1774
        %v1776 = vsub.f32 1.0, %v1775
        %v1777 = vmul.f32 %v1774, %v1776
        %v1778 = vadd.f32 %v1774, %v1777
        %vm1779 = vweird.f32 %v1596
        %vm1780 = vweird.f32 %v1774
        %vm1781 = vmor %vm1779, %vm1780
        %v1782 = vsel %vm1781, %v1774, %v1778
        %v1783 = vand.u32 2147483647, %v1596
        %vm1784 = vcmp.eq.f32.partialorder %v1783, 8.507059e+37
        %v1785 = vand.u32 %v1596, 2147483648
        %v1786 = vor.u32 1.1754944e-38, %v1785
        %v1787 = vsel %vm1784, %v1786, %v1782
        %v1788 = vrcp.pop %v1599
        %v1789 = vmul.f32 %v1599, %v1788
        %v1790 = vsub.f32 1.0, %v1789
        %v1791 = vmul.f32 %v1788, %v1790
        %v1792 = vadd.f32 %v1788, %v1791
        %vm1793 = vweird.f32 %v1599
        %vm1794 = vweird.f32 %v1788
        %vm1795 = vmor %vm1793, %vm1794
        %v1796 = vsel %vm1795, %v1788, %v1792
        %v1797 = vand.u32 2147483647, %v1599
        %vm1798 = vcmp.eq.f32.partialorder %v1797, 8.507059e+37
        %v1799 = vand.u32 %v1599, 2147483648
        %v1800 = vor.u32 1.1754944e-38, %v1799
        %v1801 = vsel %vm1798, %v1800, %v1796
        %v1802 = vrcp.pop %v1602
        %v1803 = vmul.f32 %v1602, %v1802
        %v1804 = vsub.f32 1.0, %v1803
        %v1805 = vmul.f32 %v1802, %v1804
        %v1806 = vadd.f32 %v1802, %v1805
        %vm1807 = vweird.f32 %v1602
        %vm1808 = vweird.f32 %v1802
        %vm1809 = vmor %vm1807, %vm1808
        %v1810 = vsel %vm1809, %v1802, %v1806
        %v1811 = vand.u32 2147483647, %v1602
        %vm1812 = vcmp.eq.f32.partialorder %v1811, 8.507059e+37
        %v1813 = vand.u32 %v1602, 2147483648
        %v1814 = vor.u32 1.1754944e-38, %v1813
        %v1815 = vsel %vm1812, %v1814, %v1810
        %v1816 = vrcp.pop %v1605
        %v1817 = vmul.f32 %v1605, %v1816
        %v1818 = vsub.f32 1.0, %v1817
        %v1819 = vmul.f32 %v1816, %v1818
        %v1820 = vadd.f32 %v1816, %v1819
        %vm1821 = vweird.f32 %v1605
        %vm1822 = vweird.f32 %v1816
        %vm1823 = vmor %vm1821, %vm1822
        %v1824 = vsel %vm1823, %v1816, %v1820
        %v1825 = vand.u32 2147483647, %v1605
        %vm1826 = vcmp.eq.f32.partialorder %v1825, 8.507059e+37
        %v1827 = vand.u32 %v1605, 2147483648
        %v1828 = vor.u32 1.1754944e-38, %v1827
        %v1829 = vsel %vm1826, %v1828, %v1824
        %v1830 = vmul.f32 %v1495, %v1619
        %v1831 = vmul.f32 %v1497, %v1619
        %v1832 = vmul.f32 %v1499, %v1633
        %v1833 = vmul.f32 %v1501, %v1633
        %v1834 = vmul.f32 %v1503, %v1647
        %v1835 = vmul.f32 %v1505, %v1647
        %v1836 = vmul.f32 %v1507, %v1661
        %v1837 = vmul.f32 %v1509, %v1661
        %v1838 = vmul.f32 %v1511, %v1675
        %v1839 = vmul.f32 %v1513, %v1675
        %v1840 = vmul.f32 %v1515, %v1689
        %v1841 = vmul.f32 %v1517, %v1689
        %v1842 = vmul.f32 %v1519, %v1703
        %v1843 = vmul.f32 %v1521, %v1703
        %v1844 = vmul.f32 %v1523, %v1717
        %v1845 = vmul.f32 %v1525, %v1717
        %v1846 = vmul.f32 %v1527, %v1731
        %v1847 = vmul.f32 %v1529, %v1731
        %v1848 = vmul.f32 %v1531, %v1745
        %v1849 = vmul.f32 %v1533, %v1745
        %v1850 = vmul.f32 %v1535, %v1759
        %v1851 = vmul.f32 %v1537, %v1759
        %v1852 = vmul.f32 %v1539, %v1773
        %v1853 = vmul.f32 %v1541, %v1773
        %v1854 = vmul.f32 %v1543, %v1787
        %v1855 = vmul.f32 %v1545, %v1787
        %v1856 = vmul.f32 %v1547, %v1801
        %v1857 = vmul.f32 %v1549, %v1801
        %v1858 = vmul.f32 %v1551, %v1815
        %v1859 = vmul.f32 %v1553, %v1815
        %v1860 = vmul.f32 %v1555, %v1829
        %v1861 = vmul.f32 %v1557, %v1829
        %1862 = vst [vmem:[%s334] sm:$0xff] %v1830
        %1863 = vst [vmem:[%s334 + $0x8] sm:$0xff] %v1831
        %1864 = vst [vmem:[%s334 + $0x10] sm:$0xff] %v1832
        %1865 = vst [vmem:[%s334 + $0x18] sm:$0xff] %v1833
        %1866 = vst [vmem:[%s334 + $0x20] sm:$0xff] %v1834
        %1867 = vst [vmem:[%s334 + $0x28] sm:$0xff] %v1835
        %1868 = vst [vmem:[%s334 + $0x30] sm:$0xff] %v1836
        %1869 = vst [vmem:[%s334 + $0x38] sm:$0xff] %v1837
        %1870 = vst [vmem:[%s334 + $0x40] sm:$0xff] %v1838
        %1871 = vst [vmem:[%s334 + $0x48] sm:$0xff] %v1839
        %1872 = vst [vmem:[%s334 + $0x50] sm:$0xff] %v1840
        %1873 = vst [vmem:[%s334 + $0x58] sm:$0xff] %v1841
        %1874 = vst [vmem:[%s334 + $0x60] sm:$0xff] %v1842
        %1875 = vst [vmem:[%s334 + $0x68] sm:$0xff] %v1843
        %1876 = vst [vmem:[%s334 + $0x70] sm:$0xff] %v1844
        %1877 = vst [vmem:[%s334 + $0x78] sm:$0xff] %v1845
        %1878 = vst [vmem:[%s334 + $0x80] sm:$0xff] %v1846
        %1879 = vst [vmem:[%s334 + $0x88] sm:$0xff] %v1847
        %1880 = vst [vmem:[%s334 + $0x90] sm:$0xff] %v1848
        %1881 = vst [vmem:[%s334 + $0x98] sm:$0xff] %v1849
        %1882 = vst [vmem:[%s334 + $0xa0] sm:$0xff] %v1850
        %1883 = vst [vmem:[%s334 + $0xa8] sm:$0xff] %v1851
        %1884 = vst [vmem:[%s334 + $0xb0] sm:$0xff] %v1852
        %1885 = vst [vmem:[%s334 + $0xb8] sm:$0xff] %v1853
        %1886 = vst [vmem:[%s334 + $0xc0] sm:$0xff] %v1854
        %1887 = vst [vmem:[%s334 + $0xc8] sm:$0xff] %v1855
        %1888 = vst [vmem:[%s334 + $0xd0] sm:$0xff] %v1856
        %1889 = vst [vmem:[%s334 + $0xd8] sm:$0xff] %v1857
        %1890 = vst [vmem:[%s334 + $0xe0] sm:$0xff] %v1858
        %1891 = vst [vmem:[%s334 + $0xe8] sm:$0xff] %v1859
        %1892 = vst [vmem:[%s334 + $0xf0] sm:$0xff] %v1860
        %1893 = vst [vmem:[%s334 + $0xf8] sm:$0xff] %v1861
        %1894 = vmatpush.xpose.msra.mxu0 %v1169
        %1895 = vmatpush.xpose.msra.mxu0 %v1167
        %1896 = vmatpush.xpose.msra.mxu0 %v1165
        %1897 = vmatpush.xpose.msra.mxu0 %v1163
        %1898 = vmatpush.xpose.msra.mxu0 %v1161
        %1899 = vmatpush.xpose.msra.mxu0 %v1159
        %1900 = vmatpush.xpose.msra.mxu0 %v1157
        %1901 = vmatpush.xpose.msra.mxu0 %v1155
        %1902 = vmatpush.xpose.msra.mxu0 %v1153
        %1903 = vmatpush.xpose.msra.mxu0 %v1151
        %1904 = vmatpush.xpose.msra.mxu0 %v1149
        %1905 = vmatpush.xpose.msra.mxu0 %v1147
        %1906 = vmatpush.xpose.msra.mxu0 %v1145
        %1907 = vmatpush.xpose.msra.mxu0 %v1143
        %1908 = vmatpush.xpose.msra.mxu0 %v1141
        %1909 = vmatpush.xpose.msra.mxu0 %v1139
        %1910 = vmatmul.f32.gmra.mxu0 %v491
        %v1911 = vpop.f32.mrf.mxu0
        %v1912 = vadd.f32 0.0, %v1911
        %1913 = vmatmul.f32.gmra.mxu0 %v493
        %v1914 = vpop.f32.mrf.mxu0
        %v1915 = vadd.f32 0.0, %v1914
        %1916 = vdwg.mxu0
        %1917 = vmatpush.xpose.msra.mxu0 %v1170
        %1918 = vmatpush.xpose.msra.mxu0 %v1168
        %1919 = vmatpush.xpose.msra.mxu0 %v1166
        %1920 = vmatpush.xpose.msra.mxu0 %v1164
        %1921 = vmatpush.xpose.msra.mxu0 %v1162
        %1922 = vmatpush.xpose.msra.mxu0 %v1160
        %1923 = vmatpush.xpose.msra.mxu0 %v1158
        %1924 = vmatpush.xpose.msra.mxu0 %v1156
        %1925 = vmatpush.xpose.msra.mxu0 %v1154
        %1926 = vmatpush.xpose.msra.mxu0 %v1152
        %1927 = vmatpush.xpose.msra.mxu0 %v1150
        %1928 = vmatpush.xpose.msra.mxu0 %v1148
        %1929 = vmatpush.xpose.msra.mxu0 %v1146
        %1930 = vmatpush.xpose.msra.mxu0 %v1144
        %1931 = vmatpush.xpose.msra.mxu0 %v1142
        %1932 = vmatpush.xpose.msra.mxu0 %v1140
        %1933 = vmatmul.f32.gmra.mxu0 %v492
        %v1934 = vpop.f32.mrf.mxu0
        %v1935 = vadd.f32 %v1912, %v1934
        %1936 = vmatmul.f32.gmra.mxu0 %v494
        %v1937 = vpop.f32.mrf.mxu0
        %v1938 = vadd.f32 %v1915, %v1937
        %1939 = vdwg.mxu0
        %s1940 = sld [smem:[#allocation5]]
        %v1941 = vstv %s1940
        %v1942 = vmul.f32 %v1941, %v1935
        %v1943 = vmul.f32 %v1941, %v1938
        %v1944 = vadd.f32 %v1942, %v501
        %v1945 = vadd.f32 %v1943, %v502
        %1946 = vst [vmem:[%s320] sm:$0xff] %v1944
        %1947 = vst [vmem:[%s320 + $0x8] sm:$0xff] %v1945
        %s1948 = sand.u32 %s180, 1
        %s1949 = sand.u32 %s180, 1
        %s1950 = smul.addr %s1949, 16
        %s1951 = scalar_lea.vmem [#allocation6], %s1950
        %s1952 = sand.u32 %s208, 1
        %s1953 = scalar_lea.sflag [#allocation8], %s1952
        %s1954 = sand.u32 %s208, 1
        %s1955 = smul.addr %s1954, 256
        %s1956 = scalar_lea.vmem [#allocation7], %s1955
        %s1957 = sand.u32 %s236, 1
        %s1958 = scalar_lea.sflag [#allocation10], %s1957
        %s1959 = sand.u32 %s236, 1
        %s1960 = smul.addr %s1959, 256
        %s1961 = scalar_lea.vmem [#allocation9], %s1960
        // Predicated region
        $region49: #{self_attention_block.1} parent=43 // pred_check
          %p1962 = pneg %p190
        $region50: #{self_attention_block.1} parent=43 // pred_check_branch
          %1964 = sbr.rel (%p1962) target = $region52
        $region51: #{self_attention_block.1} parent=43 // pred_region
          %s1965 = smul.addr %s31, 4
          %s1966 = sadd.s32 %s32, %s1965
          %s1967 = smul.addr %s1966, 8
          %s1968 = scalar_lea.vmem %s6, %s1967
          // Predicated region
          $region53: #{self_attention_block.1} parent=51 // pred_check
            _
          $region54: #{self_attention_block.1} parent=51 // pred_check_branch
            %1970 = sbr.rel (0) target = $region56
          $region55: #{self_attention_block.1} parent=51 // pred_region
            // Predicated region
            $region57: #{self_attention_block.1} parent=55 // pred_check
              _
            $region58: #{self_attention_block.1} parent=55 // pred_check_branch
              %1972 = sbr.rel (0) target = $region60
            $region59: #{self_attention_block.1} parent=55 // pred_region
              // Predicated region
              $region72: #{self_attention_block.1} parent=59 // pred_check
                _
              $region73: #{self_attention_block.1} parent=59 // pred_check_branch
                %1990 = sbr.rel (0) target = $region75
              $region74: #{self_attention_block.1} parent=59 // pred_region
                loop: start=0, step=1, limit=1
                $region76: #{self_attention_block.1} parent=74 // loop_pre_header
                  _
                $region77: #{self_attention_block.1} parent=74 // loop_header
                  %s1992 = sphi 0, %s1996
                  %p1993 = scmp.ge.s32.totalorder %s1992, 1
                  %s1997 = sphi %s1951, %s1951
                  %s1998 = sphi %s1968, %s1968
                $region78: #{self_attention_block.1} parent=74 // loop_header_branch
                  %1995 = sbr.rel (%p1993) target = $region82
                $region79: #{self_attention_block.1} parent=74 // loop_body
                  %v1999 = vld [vmem:[%s1997] sm:$0xff]
                  %2000 = vst [vmem:[%s1998] sm:$0xff] %v1999
                  %v2001 = vld [vmem:[%s1997 + $0x8] sm:$0xff]
                  %2002 = vst [vmem:[%s1998 + $0x10] sm:$0xff] %v2001
                $region80: #{self_attention_block.1} parent=74 // loop_footer
                  %s1996 = sadd.s32 1, %s1992
                $region81: #{self_attention_block.1} parent=74 // loop_footer_branch
                  %1991 = sbr.rel target = $region77
                $region82: #{self_attention_block.1} parent=74 // loop_exit
                  _
              $region75: #{self_attention_block.1} parent=59 // pred_fallthru
                _
              // Predicated region
              $region83: #{self_attention_block.1} parent=59 // pred_check
                _
              $region84: #{self_attention_block.1} parent=59 // pred_check_branch
                %2004 = sbr.rel target = $region86
              $region85: #{self_attention_block.1} parent=59 // pred_region
                _
              $region86: #{self_attention_block.1} parent=59 // pred_fallthru
                _
            $region60: #{self_attention_block.1} parent=55 // pred_fallthru
              _
            // Predicated region
            $region61: #{self_attention_block.1} parent=55 // pred_check
              _
            $region62: #{self_attention_block.1} parent=55 // pred_check_branch
              %1974 = sbr.rel target = $region64
            $region63: #{self_attention_block.1} parent=55 // pred_region
              %s1976 = ssub.s32 256, 1
              loop: start=0, step=1, limit=1
              $region65: #{self_attention_block.1} parent=63 // loop_pre_header
                _
              $region66: #{self_attention_block.1} parent=63 // loop_header
                %s1978 = sphi 0, %s1982
                %p1979 = scmp.ge.s32.totalorder %s1978, 1
                %s1983 = sphi %s1951, %s1951
                %s1984 = sphi %s1968, %s1968
              $region67: #{self_attention_block.1} parent=63 // loop_header_branch
                %1981 = sbr.rel (%p1979) target = $region71
              $region68: #{self_attention_block.1} parent=63 // loop_body
                %v1985 = vld [vmem:[%s1983] sm:%s1976]
                %1986 = vst [vmem:[%s1984] sm:%s1976] %v1985
                %v1987 = vld [vmem:[%s1983 + $0x8] sm:%s1976]
                %1988 = vst [vmem:[%s1984 + $0x10] sm:%s1976] %v1987
              $region69: #{self_attention_block.1} parent=63 // loop_footer
                %s1982 = sadd.s32 1, %s1978
              $region70: #{self_attention_block.1} parent=63 // loop_footer_branch
                %1977 = sbr.rel target = $region66
              $region71: #{self_attention_block.1} parent=63 // loop_exit
                _
            $region64: #{self_attention_block.1} parent=55 // pred_fallthru
              _
          $region56: #{self_attention_block.1} parent=51 // pred_fallthru
            _
          %2005 = vnop
        $region52: #{self_attention_block.1} parent=43 // pred_fallthru
          _
        // Predicated region
        $region87: #{self_attention_block.1} parent=43 // pred_check
          %p2006 = pneg %p218
        $region88: #{self_attention_block.1} parent=43 // pred_check_branch
          %2008 = sbr.rel (%p2006) target = $region90
        $region89: #{self_attention_block.1} parent=43 // pred_region
          %s2009 = smul.u32 16, %s32
          %2011 = vsyncadd %s1953, 0
          %s2012 = smul.addr %s2009, 2
          %s2013 = smul.addr %s31, 64
          %s2014 = sadd.s32 %s2012, %s2013
          %s2015 = smul.addr %s2014, 8
          %s2016 = scalar_lea.hbm %s7, %s2015
          %s2017 = sshll.u32 %s1956, 4
          %s2018 = int_to_ptr.vmem [resolvable:$true] %s2017
          %s2019 = sshll.u32 %s2016, 4
          %s2020 = int_to_ptr.hbm [resolvable:$true] %s2019
          %2025 = dma.vmem_to_hbm [thread:$0]  %s2018, 4096, %s2020, %s1953, 256, 256, 16
        $region90: #{self_attention_block.1} parent=43 // pred_fallthru
          _
        // Predicated region
        $region91: #{self_attention_block.1} parent=43 // pred_check
          %p2026 = pneg %p246
        $region92: #{self_attention_block.1} parent=43 // pred_check_branch
          %2028 = sbr.rel (%p2026) target = $region94
        $region93: #{self_attention_block.1} parent=43 // pred_region
          %s2029 = smul.u32 16, %s32
          %2031 = vsyncadd %s1958, 0
          %s2032 = smul.addr %s2029, 2
          %s2033 = smul.addr %s31, 64
          %s2034 = sadd.s32 %s2032, %s2033
          %s2035 = smul.addr %s2034, 8
          %s2036 = scalar_lea.hbm %s8, %s2035
          %s2037 = sshll.u32 %s1961, 4
          %s2038 = int_to_ptr.vmem [resolvable:$true] %s2037
          %s2039 = sshll.u32 %s2036, 4
          %s2040 = int_to_ptr.hbm [resolvable:$true] %s2039
          %2045 = dma.vmem_to_hbm [thread:$0]  %s2038, 4096, %s2040, %s1958, 256, 256, 16
        $region94: #{self_attention_block.1} parent=43 // pred_fallthru
          _
      $region44: #{self_attention_block.1} parent=5 // pred_fallthru
        _
      %p2046 = scmp.le.s32.totalorder 2, %s22
      // Predicated region
      $region95: #{self_attention_block.1} parent=5 // pred_check
        %p2047 = pneg %p2046
      $region96: #{self_attention_block.1} parent=5 // pred_check_branch
        %2049 = sbr.rel (%p2047) target = $region98
      $region97: #{self_attention_block.1} parent=5 // pred_region
        %s2050 = ssub.s32 %s22, 2
        // Predicated region
        $region99: #{self_attention_block.1} parent=97 // pred_check
          %p2051 = pneg %p196
        $region100: #{self_attention_block.1} parent=97 // pred_check_branch
          %2053 = sbr.rel (%p2051) target = $region102
        $region101: #{self_attention_block.1} parent=97 // pred_region
          %s2054 = sand.u32 %s181, 1
          %s2055 = sand.u32 %s181, 1
          %s2056 = smul.addr %s2055, 16
          %s2057 = scalar_lea.vmem [#allocation6], %s2056
        $region102: #{self_attention_block.1} parent=97 // pred_fallthru
          _
        // Predicated region
        $region103: #{self_attention_block.1} parent=97 // pred_check
          %p2058 = pneg %p224
        $region104: #{self_attention_block.1} parent=97 // pred_check_branch
          %2060 = sbr.rel (%p2058) target = $region106
        $region105: #{self_attention_block.1} parent=97 // pred_region
          %s2061 = sand.u32 %s209, 1
          %s2062 = scalar_lea.sflag [#allocation8], %s2061
          %s2063 = sand.u32 %s209, 1
          %s2064 = smul.addr %s2063, 256
          %s2065 = scalar_lea.vmem [#allocation7], %s2064
          %2067 = dma.done %s2062, 4096
        $region106: #{self_attention_block.1} parent=97 // pred_fallthru
          _
        // Predicated region
        $region107: #{self_attention_block.1} parent=97 // pred_check
          %p2068 = pneg %p252
        $region108: #{self_attention_block.1} parent=97 // pred_check_branch
          %2070 = sbr.rel (%p2068) target = $region110
        $region109: #{self_attention_block.1} parent=97 // pred_region
          %s2071 = sand.u32 %s237, 1
          %s2072 = scalar_lea.sflag [#allocation10], %s2071
          %s2073 = sand.u32 %s237, 1
          %s2074 = smul.addr %s2073, 256
          %s2075 = scalar_lea.vmem [#allocation9], %s2074
          %2077 = dma.done %s2072, 4096
        $region110: #{self_attention_block.1} parent=97 // pred_fallthru
          _
      $region98: #{self_attention_block.1} parent=5 // pred_fallthru
        _
    $region6: #{self_attention_block.1} parent=1 // loop_footer
      %s26 = sadd.s32 1, %s22
    $region7: #{self_attention_block.1} parent=1 // loop_footer_branch
      %21 = sbr.rel target = $region3
    $region8: #{self_attention_block.1} parent=1 // loop_exit
      _
    %2078 = vsyncpa [#allocation8], 1
    %s2079 = scalar_lea.sflag [#allocation8], 1
    %2080 = vsyncpa %s2079, 1
    %2081 = vsyncpa [#allocation10], 1
    %s2082 = scalar_lea.sflag [#allocation10], 1
    %2083 = vsyncpa %s2082, 1

</llo_original>
